<compile_context>
chip_gen: v7x
topology: tpu7x:2x2x1
jax: 0.10.0
libtpu: 0.0.40
codegen_flags: <defaults>
</compile_context>

<pallas_src>
import functools

import jax
import jax.numpy as jnp
from jax import lax
from jax.experimental import pallas as pl
from jax.experimental.pallas import tpu as pltpu


def eeg_rnn_kernel(x_ref, wih0_ref, whh0_ref, b0_ref,
                   wih1_ref, whh1_ref, b1_ref,
                   wfc_ref, bfc_ref, out_ref, seq_ref, *, T, B):
    # x_ref:   (T*B, 1)  time-major flattened input, row index = t*B + b
    # wih0:    (1, H) = W_ih_l0^T      whh0: (H, H) = W_hh_l0^T
    # b0:      (1, H) = b_ih_l0 + b_hh_l0
    # wih1:    (H, H) = W_ih_l1^T      whh1: (H, H) = W_hh_l1^T
    # b1:      (1, H) = b_ih_l1 + b_hh_l1
    # wfc:     (H, C) = W_fc^T         bfc:  (1, C)
    # out_ref: (T*B, C)
    # seq_ref: (T*B, H) VMEM scratch (reused: h1 sequence, then h2 sequence)
    H = whh0_ref.shape[0]

    whh0 = whh0_ref[...]
    whh1 = whh1_ref[...]

    # ---- Hoisted layer-0 input projection: one broadcast VPU pass, no MXU ----
    # (T*B, 1) * (1, H) + (1, H)  ->  (T*B, H)
    u0 = x_ref[...] * wih0_ref[...] + b0_ref[...]

    # ---- Pass A: layer-0 recurrence only (T is small & static -> full unroll) ----
    h1 = jnp.zeros((B, H), jnp.float32)
    for t in range(T):
        h1 = jnp.tanh(u0[t * B:(t + 1) * B, :]
                      + jnp.dot(h1, whh0, preferred_element_type=jnp.float32))
        seq_ref[t * B:(t + 1) * B, :] = h1

    # ---- Hoisted layer-1 input projection: ONE batched matmul over all timesteps ----
    u1 = (jnp.dot(seq_ref[...], wih1_ref[...], preferred_element_type=jnp.float32)
          + b1_ref[...])                                         # (T*B, H)

    # ---- Pass B: layer-1 recurrence only ----
    h2 = jnp.zeros((B, H), jnp.float32)
    for t in range(T):
        h2 = jnp.tanh(u1[t * B:(t + 1) * B, :]
                      + jnp.dot(h2, whh1, preferred_element_type=jnp.float32))
        # u1 is already materialized as a value, so the scratch can be reused.
        seq_ref[t * B:(t + 1) * B, :] = h2

    # ---- FC hoisted out of the time loop: one matmul + one store ----
    y = (jnp.dot(seq_ref[...], wfc_ref[...], preferred_element_type=jnp.float32)
         + bfc_ref[...])                                         # (T*B, C)
    out_ref[...] = y.astype(out_ref.dtype)


def eeg_forward(x, params):
    """x: (B, T, 1) float32 -> (B, T, num_classes) float32."""
    B, T, _ = x.shape
    H = params["w_hh_l0"].shape[0]
    C = params["fc_w"].shape[0]

    # batch-first -> time-major -> flatten rows (row = t*B + b)
    x_flat = jnp.transpose(x, (1, 0, 2)).astype(jnp.float32).reshape(T * B, 1)
    args = (
        x_flat,
        params["w_ih_l0"].T,                                   # (1, H)
        params["w_hh_l0"].T,                                   # (H, H)
        (params["b_ih_l0"] + params["b_hh_l0"])[None, :],      # (1, H)
        params["w_ih_l1"].T,                                   # (H, H)
        params["w_hh_l1"].T,                                   # (H, H)
        (params["b_ih_l1"] + params["b_hh_l1"])[None, :],      # (1, H)
        params["fc_w"].T,                                      # (H, C)
        params["fc_b"][None, :],                               # (1, C)
    )
    out_flat = pl.pallas_call(
        functools.partial(eeg_rnn_kernel, T=T, B=B),
        out_shape=jax.ShapeDtypeStruct((T * B, C), jnp.float32),
        in_specs=[pl.BlockSpec(memory_space=pltpu.MemorySpace.VMEM)] * len(args),
        out_specs=pl.BlockSpec(memory_space=pltpu.MemorySpace.VMEM),
        scratch_shapes=[pltpu.VMEM((T * B, H), jnp.float32)],
    )(*args)
    return jnp.transpose(out_flat.reshape(T, B, C), (1, 0, 2))   # (B, T, C)


def eeg_forward_ref(x, params):
    """Pure-JAX reference matching torch.nn.RNN(1,16,2,batch_first=True)+Linear."""
    B, T, _ = x.shape
    H = params["w_hh_l0"].shape[0]

    def scan_layer(seq, w_ih, w_hh, b_ih, b_hh):
        def step(h, x_t):
            h = jnp.tanh(x_t @ w_ih.T + b_ih + h @ w_hh.T + b_hh)
            return h, h
        _, ys = lax.scan(step, jnp.zeros((B, H), jnp.float32), seq)
        return ys  # (T, B, H)

    seq = jnp.transpose(x, (1, 0, 2)).astype(jnp.float32)
    h1 = scan_layer(seq, params["w_ih_l0"], params["w_hh_l0"],
                    params["b_ih_l0"], params["b_hh_l0"])
    h2 = scan_layer(h1, params["w_ih_l1"], params["w_hh_l1"],
                    params["b_ih_l1"], params["b_hh_l1"])
    y = h2 @ params["fc_w"].T + params["fc_b"]
    return jnp.transpose(y, (1, 0, 2))


def init_params(key, hidden=16, num_classes=5):
    # Deterministic init mimicking PyTorch's U(-1/sqrt(H), 1/sqrt(H)).
    k = 1.0 / jnp.sqrt(jnp.float32(hidden))
    names_shapes = [
        ("w_ih_l0", (hidden, 1)),
        ("w_hh_l0", (hidden, hidden)),
        ("b_ih_l0", (hidden,)),
        ("b_hh_l0", (hidden,)),
        ("w_ih_l1", (hidden, hidden)),
        ("w_hh_l1", (hidden, hidden)),
        ("b_ih_l1", (hidden,)),
        ("b_hh_l1", (hidden,)),
        ("fc_w", (num_classes, hidden)),
        ("fc_b", (num_classes,)),
    ]
    params = {}
    keys = jax.random.split(key, len(names_shapes))
    for sub, (name, shape) in zip(keys, names_shapes):
        params[name] = jax.random.uniform(sub, shape, jnp.float32, minval=-k, maxval=k)
    return params


if __name__ == "__main__":
    B, T, C, H = 2, 8, 5, 16
    key = jax.random.PRNGKey(0)
    k_x, k_p = jax.random.split(key)
    x = jax.random.normal(k_x, (B, T, 1), jnp.float32)
    params = init_params(k_p, hidden=H, num_classes=C)

    out = jax.block_until_ready(eeg_forward(x, params))
    ref = jax.block_until_ready(eeg_forward_ref(x, params))

    assert out.shape == (B, T, C), out.shape
    assert jnp.allclose(out, ref, atol=1e-5, rtol=1e-5), float(jnp.max(jnp.abs(out - ref)))
    print("KERNEL_OK")
</pallas_src>

<mosaic_0001>
module attributes {stable_mosaic.version = 11 : i64} {
  func.func @eeg_rnn_kernel(%arg0: memref<16x1xf32, #tpu.memory_space<vmem>>, %arg1: memref<1x16xf32, #tpu.memory_space<vmem>>, %arg2: memref<16x16xf32, #tpu.memory_space<vmem>>, %arg3: memref<1x16xf32, #tpu.memory_space<vmem>>, %arg4: memref<16x16xf32, #tpu.memory_space<vmem>>, %arg5: memref<16x16xf32, #tpu.memory_space<vmem>>, %arg6: memref<1x16xf32, #tpu.memory_space<vmem>>, %arg7: memref<16x5xf32, #tpu.memory_space<vmem>>, %arg8: memref<1x5xf32, #tpu.memory_space<vmem>>, %arg9: memref<16x5xf32, #tpu.memory_space<vmem>>, %arg10: memref<16x16xf32, #tpu.memory_space<vmem>>) attributes {dimension_semantics = [], scalar_prefetch = 0 : i64, scratch_operands = 1 : i64, tpu.core_type = #tpu.core_type<tc>} {
    %c0 = arith.constant 0 : index
    %c0_0 = arith.constant 0 : index
    %0 = vector.load %arg2[%c0, %c0_0] : memref<16x16xf32, #tpu.memory_space<vmem>>, vector<16x16xf32>
    %c0_1 = arith.constant 0 : index
    %c0_2 = arith.constant 0 : index
    %1 = vector.load %arg5[%c0_1, %c0_2] : memref<16x16xf32, #tpu.memory_space<vmem>>, vector<16x16xf32>
    %c0_3 = arith.constant 0 : index
    %c0_4 = arith.constant 0 : index
    %2 = vector.load %arg0[%c0_3, %c0_4] : memref<16x1xf32, #tpu.memory_space<vmem>>, vector<16x1xf32>
    %c0_5 = arith.constant 0 : index
    %c0_6 = arith.constant 0 : index
    %3 = vector.load %arg1[%c0_5, %c0_6] : memref<1x16xf32, #tpu.memory_space<vmem>>, vector<1x16xf32>
    %4 = vector.broadcast %2 : vector<16x1xf32> to vector<16x16xf32>
    %5 = vector.broadcast %3 : vector<1x16xf32> to vector<16x16xf32>
    %6 = arith.mulf %4, %5 : vector<16x16xf32>
    %c0_7 = arith.constant 0 : index
    %c0_8 = arith.constant 0 : index
    %7 = vector.load %arg3[%c0_7, %c0_8] : memref<1x16xf32, #tpu.memory_space<vmem>>, vector<1x16xf32>
    %8 = vector.broadcast %7 : vector<1x16xf32> to vector<16x16xf32>
    %9 = arith.addf %6, %8 : vector<16x16xf32>
    %cst = arith.constant 0.000000e+00 : f32
    %10 = vector.broadcast %cst : f32 to vector<2x16xf32>
    %11 = vector.extract_strided_slice %9 {offsets = [0, 0], sizes = [2, 16], strides = [1, 1]} : vector<16x16xf32> to vector<2x16xf32>
    %cst_9 = arith.constant dense<0.000000e+00> : vector<2x16xf32>
    %12 = tpu.matmul %10, %0, %cst_9 {dimension_numbers = #tpu.dot_dimension_numbers<[1], [0], [0], [1], [0, 0, 1, 1], [], []>} : vector<2x16xf32>, vector<16x16xf32>, vector<2x16xf32> -> vector<2x16xf32>
    %13 = arith.addf %11, %12 : vector<2x16xf32>
    %14 = math.tanh %13 : vector<2x16xf32>
    %c0_10 = arith.constant 0 : index
    %c0_11 = arith.constant 0 : index
    %15 = vector.load %arg10[%c0_10, %c0_11] : memref<16x16xf32, #tpu.memory_space<vmem>>, vector<2x16xf32>
    tpu.vector_store %arg10[%c0_10, %c0_11], %14 {strides = array<i32>} : memref<16x16xf32, #tpu.memory_space<vmem>>, vector<2x16xf32>,
    %16 = vector.extract_strided_slice %9 {offsets = [2, 0], sizes = [2, 16], strides = [1, 1]} : vector<16x16xf32> to vector<2x16xf32>
    %cst_12 = arith.constant dense<0.000000e+00> : vector<2x16xf32>
    %17 = tpu.matmul %14, %0, %cst_12 {dimension_numbers = #tpu.dot_dimension_numbers<[1], [0], [0], [1], [0, 0, 1, 1], [], []>} : vector<2x16xf32>, vector<16x16xf32>, vector<2x16xf32> -> vector<2x16xf32>
    %18 = arith.addf %16, %17 : vector<2x16xf32>
    %19 = math.tanh %18 : vector<2x16xf32>
    %c2 = arith.constant 2 : index
    %c0_13 = arith.constant 0 : index
    %20 = vector.load %arg10[%c2, %c0_13] : memref<16x16xf32, #tpu.memory_space<vmem>>, vector<2x16xf32>
    tpu.vector_store %arg10[%c2, %c0_13], %19 {strides = array<i32>} : memref<16x16xf32, #tpu.memory_space<vmem>>, vector<2x16xf32>,
    %21 = vector.extract_strided_slice %9 {offsets = [4, 0], sizes = [2, 16], strides = [1, 1]} : vector<16x16xf32> to vector<2x16xf32>
    %cst_14 = arith.constant dense<0.000000e+00> : vector<2x16xf32>
    %22 = tpu.matmul %19, %0, %cst_14 {dimension_numbers = #tpu.dot_dimension_numbers<[1], [0], [0], [1], [0, 0, 1, 1], [], []>} : vector<2x16xf32>, vector<16x16xf32>, vector<2x16xf32> -> vector<2x16xf32>
    %23 = arith.addf %21, %22 : vector<2x16xf32>
    %24 = math.tanh %23 : vector<2x16xf32>
    %c4 = arith.constant 4 : index
    %c0_15 = arith.constant 0 : index
    %25 = vector.load %arg10[%c4, %c0_15] : memref<16x16xf32, #tpu.memory_space<vmem>>, vector<2x16xf32>
    tpu.vector_store %arg10[%c4, %c0_15], %24 {strides = array<i32>} : memref<16x16xf32, #tpu.memory_space<vmem>>, vector<2x16xf32>,
    %26 = vector.extract_strided_slice %9 {offsets = [6, 0], sizes = [2, 16], strides = [1, 1]} : vector<16x16xf32> to vector<2x16xf32>
    %cst_16 = arith.constant dense<0.000000e+00> : vector<2x16xf32>
    %27 = tpu.matmul %24, %0, %cst_16 {dimension_numbers = #tpu.dot_dimension_numbers<[1], [0], [0], [1], [0, 0, 1, 1], [], []>} : vector<2x16xf32>, vector<16x16xf32>, vector<2x16xf32> -> vector<2x16xf32>
    %28 = arith.addf %26, %27 : vector<2x16xf32>
    %29 = math.tanh %28 : vector<2x16xf32>
    %c6 = arith.constant 6 : index
    %c0_17 = arith.constant 0 : index
    %30 = vector.load %arg10[%c6, %c0_17] : memref<16x16xf32, #tpu.memory_space<vmem>>, vector<2x16xf32>
    tpu.vector_store %arg10[%c6, %c0_17], %29 {strides = array<i32>} : memref<16x16xf32, #tpu.memory_space<vmem>>, vector<2x16xf32>,
    %31 = vector.extract_strided_slice %9 {offsets = [8, 0], sizes = [2, 16], strides = [1, 1]} : vector<16x16xf32> to vector<2x16xf32>
    %cst_18 = arith.constant dense<0.000000e+00> : vector<2x16xf32>
    %32 = tpu.matmul %29, %0, %cst_18 {dimension_numbers = #tpu.dot_dimension_numbers<[1], [0], [0], [1], [0, 0, 1, 1], [], []>} : vector<2x16xf32>, vector<16x16xf32>, vector<2x16xf32> -> vector<2x16xf32>
    %33 = arith.addf %31, %32 : vector<2x16xf32>
    %34 = math.tanh %33 : vector<2x16xf32>
    %c8 = arith.constant 8 : index
    %c0_19 = arith.constant 0 : index
    %35 = vector.load %arg10[%c8, %c0_19] : memref<16x16xf32, #tpu.memory_space<vmem>>, vector<2x16xf32>
    tpu.vector_store %arg10[%c8, %c0_19], %34 {strides = array<i32>} : memref<16x16xf32, #tpu.memory_space<vmem>>, vector<2x16xf32>,
    %36 = vector.extract_strided_slice %9 {offsets = [10, 0], sizes = [2, 16], strides = [1, 1]} : vector<16x16xf32> to vector<2x16xf32>
    %cst_20 = arith.constant dense<0.000000e+00> : vector<2x16xf32>
    %37 = tpu.matmul %34, %0, %cst_20 {dimension_numbers = #tpu.dot_dimension_numbers<[1], [0], [0], [1], [0, 0, 1, 1], [], []>} : vector<2x16xf32>, vector<16x16xf32>, vector<2x16xf32> -> vector<2x16xf32>
    %38 = arith.addf %36, %37 : vector<2x16xf32>
    %39 = math.tanh %38 : vector<2x16xf32>
    %c10 = arith.constant 10 : index
    %c0_21 = arith.constant 0 : index
    %40 = vector.load %arg10[%c10, %c0_21] : memref<16x16xf32, #tpu.memory_space<vmem>>, vector<2x16xf32>
    tpu.vector_store %arg10[%c10, %c0_21], %39 {strides = array<i32>} : memref<16x16xf32, #tpu.memory_space<vmem>>, vector<2x16xf32>,
    %41 = vector.extract_strided_slice %9 {offsets = [12, 0], sizes = [2, 16], strides = [1, 1]} : vector<16x16xf32> to vector<2x16xf32>
    %cst_22 = arith.constant dense<0.000000e+00> : vector<2x16xf32>
    %42 = tpu.matmul %39, %0, %cst_22 {dimension_numbers = #tpu.dot_dimension_numbers<[1], [0], [0], [1], [0, 0, 1, 1], [], []>} : vector<2x16xf32>, vector<16x16xf32>, vector<2x16xf32> -> vector<2x16xf32>
    %43 = arith.addf %41, %42 : vector<2x16xf32>
    %44 = math.tanh %43 : vector<2x16xf32>
    %c12 = arith.constant 12 : index
    %c0_23 = arith.constant 0 : index
    %45 = vector.load %arg10[%c12, %c0_23] : memref<16x16xf32, #tpu.memory_space<vmem>>, vector<2x16xf32>
    tpu.vector_store %arg10[%c12, %c0_23], %44 {strides = array<i32>} : memref<16x16xf32, #tpu.memory_space<vmem>>, vector<2x16xf32>,
    %46 = vector.extract_strided_slice %9 {offsets = [14, 0], sizes = [2, 16], strides = [1, 1]} : vector<16x16xf32> to vector<2x16xf32>
    %cst_24 = arith.constant dense<0.000000e+00> : vector<2x16xf32>
    %47 = tpu.matmul %44, %0, %cst_24 {dimension_numbers = #tpu.dot_dimension_numbers<[1], [0], [0], [1], [0, 0, 1, 1], [], []>} : vector<2x16xf32>, vector<16x16xf32>, vector<2x16xf32> -> vector<2x16xf32>
    %48 = arith.addf %46, %47 : vector<2x16xf32>
    %49 = math.tanh %48 : vector<2x16xf32>
    %c14 = arith.constant 14 : index
    %c0_25 = arith.constant 0 : index
    %50 = vector.load %arg10[%c14, %c0_25] : memref<16x16xf32, #tpu.memory_space<vmem>>, vector<2x16xf32>
    tpu.vector_store %arg10[%c14, %c0_25], %49 {strides = array<i32>} : memref<16x16xf32, #tpu.memory_space<vmem>>, vector<2x16xf32>,
    %c0_26 = arith.constant 0 : index
    %c0_27 = arith.constant 0 : index
    %51 = vector.load %arg10[%c0_26, %c0_27] : memref<16x16xf32, #tpu.memory_space<vmem>>, vector<16x16xf32>
    %c0_28 = arith.constant 0 : index
    %c0_29 = arith.constant 0 : index
    %52 = vector.load %arg4[%c0_28, %c0_29] : memref<16x16xf32, #tpu.memory_space<vmem>>, vector<16x16xf32>
    %cst_30 = arith.constant dense<0.000000e+00> : vector<16x16xf32>
    %53 = tpu.matmul %51, %52, %cst_30 {dimension_numbers = #tpu.dot_dimension_numbers<[1], [0], [0], [1], [0, 0, 1, 1], [], []>} : vector<16x16xf32>, vector<16x16xf32>, vector<16x16xf32> -> vector<16x16xf32>
    %c0_31 = arith.constant 0 : index
    %c0_32 = arith.constant 0 : index
    %54 = vector.load %arg6[%c0_31, %c0_32] : memref<1x16xf32, #tpu.memory_space<vmem>>, vector<1x16xf32>
    %55 = vector.broadcast %54 : vector<1x16xf32> to vector<16x16xf32>
    %56 = arith.addf %53, %55 : vector<16x16xf32>
    %cst_33 = arith.constant 0.000000e+00 : f32
    %57 = vector.broadcast %cst_33 : f32 to vector<2x16xf32>
    %58 = vector.extract_strided_slice %56 {offsets = [0, 0], sizes = [2, 16], strides = [1, 1]} : vector<16x16xf32> to vector<2x16xf32>
    %cst_34 = arith.constant dense<0.000000e+00> : vector<2x16xf32>
    %59 = tpu.matmul %57, %1, %cst_34 {dimension_numbers = #tpu.dot_dimension_numbers<[1], [0], [0], [1], [0, 0, 1, 1], [], []>} : vector<2x16xf32>, vector<16x16xf32>, vector<2x16xf32> -> vector<2x16xf32>
    %60 = arith.addf %58, %59 : vector<2x16xf32>
    %61 = math.tanh %60 : vector<2x16xf32>
    %c0_35 = arith.constant 0 : index
    %c0_36 = arith.constant 0 : index
    %62 = vector.load %arg10[%c0_35, %c0_36] : memref<16x16xf32, #tpu.memory_space<vmem>>, vector<2x16xf32>
    tpu.vector_store %arg10[%c0_35, %c0_36], %61 {strides = array<i32>} : memref<16x16xf32, #tpu.memory_space<vmem>>, vector<2x16xf32>,
    %63 = vector.extract_strided_slice %56 {offsets = [2, 0], sizes = [2, 16], strides = [1, 1]} : vector<16x16xf32> to vector<2x16xf32>
    %cst_37 = arith.constant dense<0.000000e+00> : vector<2x16xf32>
    %64 = tpu.matmul %61, %1, %cst_37 {dimension_numbers = #tpu.dot_dimension_numbers<[1], [0], [0], [1], [0, 0, 1, 1], [], []>} : vector<2x16xf32>, vector<16x16xf32>, vector<2x16xf32> -> vector<2x16xf32>
    %65 = arith.addf %63, %64 : vector<2x16xf32>
    %66 = math.tanh %65 : vector<2x16xf32>
    %c2_38 = arith.constant 2 : index
    %c0_39 = arith.constant 0 : index
    %67 = vector.load %arg10[%c2_38, %c0_39] : memref<16x16xf32, #tpu.memory_space<vmem>>, vector<2x16xf32>
    tpu.vector_store %arg10[%c2_38, %c0_39], %66 {strides = array<i32>} : memref<16x16xf32, #tpu.memory_space<vmem>>, vector<2x16xf32>,
    %68 = vector.extract_strided_slice %56 {offsets = [4, 0], sizes = [2, 16], strides = [1, 1]} : vector<16x16xf32> to vector<2x16xf32>
    %cst_40 = arith.constant dense<0.000000e+00> : vector<2x16xf32>
    %69 = tpu.matmul %66, %1, %cst_40 {dimension_numbers = #tpu.dot_dimension_numbers<[1], [0], [0], [1], [0, 0, 1, 1], [], []>} : vector<2x16xf32>, vector<16x16xf32>, vector<2x16xf32> -> vector<2x16xf32>
    %70 = arith.addf %68, %69 : vector<2x16xf32>
    %71 = math.tanh %70 : vector<2x16xf32>
    %c4_41 = arith.constant 4 : index
    %c0_42 = arith.constant 0 : index
    %72 = vector.load %arg10[%c4_41, %c0_42] : memref<16x16xf32, #tpu.memory_space<vmem>>, vector<2x16xf32>
    tpu.vector_store %arg10[%c4_41, %c0_42], %71 {strides = array<i32>} : memref<16x16xf32, #tpu.memory_space<vmem>>, vector<2x16xf32>,
    %73 = vector.extract_strided_slice %56 {offsets = [6, 0], sizes = [2, 16], strides = [1, 1]} : vector<16x16xf32> to vector<2x16xf32>
    %cst_43 = arith.constant dense<0.000000e+00> : vector<2x16xf32>
    %74 = tpu.matmul %71, %1, %cst_43 {dimension_numbers = #tpu.dot_dimension_numbers<[1], [0], [0], [1], [0, 0, 1, 1], [], []>} : vector<2x16xf32>, vector<16x16xf32>, vector<2x16xf32> -> vector<2x16xf32>
    %75 = arith.addf %73, %74 : vector<2x16xf32>
    %76 = math.tanh %75 : vector<2x16xf32>
    %c6_44 = arith.constant 6 : index
    %c0_45 = arith.constant 0 : index
    %77 = vector.load %arg10[%c6_44, %c0_45] : memref<16x16xf32, #tpu.memory_space<vmem>>, vector<2x16xf32>
    tpu.vector_store %arg10[%c6_44, %c0_45], %76 {strides = array<i32>} : memref<16x16xf32, #tpu.memory_space<vmem>>, vector<2x16xf32>,
    %78 = vector.extract_strided_slice %56 {offsets = [8, 0], sizes = [2, 16], strides = [1, 1]} : vector<16x16xf32> to vector<2x16xf32>
    %cst_46 = arith.constant dense<0.000000e+00> : vector<2x16xf32>
    %79 = tpu.matmul %76, %1, %cst_46 {dimension_numbers = #tpu.dot_dimension_numbers<[1], [0], [0], [1], [0, 0, 1, 1], [], []>} : vector<2x16xf32>, vector<16x16xf32>, vector<2x16xf32> -> vector<2x16xf32>
    %80 = arith.addf %78, %79 : vector<2x16xf32>
    %81 = math.tanh %80 : vector<2x16xf32>
    %c8_47 = arith.constant 8 : index
    %c0_48 = arith.constant 0 : index
    %82 = vector.load %arg10[%c8_47, %c0_48] : memref<16x16xf32, #tpu.memory_space<vmem>>, vector<2x16xf32>
    tpu.vector_store %arg10[%c8_47, %c0_48], %81 {strides = array<i32>} : memref<16x16xf32, #tpu.memory_space<vmem>>, vector<2x16xf32>,
    %83 = vector.extract_strided_slice %56 {offsets = [10, 0], sizes = [2, 16], strides = [1, 1]} : vector<16x16xf32> to vector<2x16xf32>
    %cst_49 = arith.constant dense<0.000000e+00> : vector<2x16xf32>
    %84 = tpu.matmul %81, %1, %cst_49 {dimension_numbers = #tpu.dot_dimension_numbers<[1], [0], [0], [1], [0, 0, 1, 1], [], []>} : vector<2x16xf32>, vector<16x16xf32>, vector<2x16xf32> -> vector<2x16xf32>
    %85 = arith.addf %83, %84 : vector<2x16xf32>
    %86 = math.tanh %85 : vector<2x16xf32>
    %c10_50 = arith.constant 10 : index
    %c0_51 = arith.constant 0 : index
    %87 = vector.load %arg10[%c10_50, %c0_51] : memref<16x16xf32, #tpu.memory_space<vmem>>, vector<2x16xf32>
    tpu.vector_store %arg10[%c10_50, %c0_51], %86 {strides = array<i32>} : memref<16x16xf32, #tpu.memory_space<vmem>>, vector<2x16xf32>,
    %88 = vector.extract_strided_slice %56 {offsets = [12, 0], sizes = [2, 16], strides = [1, 1]} : vector<16x16xf32> to vector<2x16xf32>
    %cst_52 = arith.constant dense<0.000000e+00> : vector<2x16xf32>
    %89 = tpu.matmul %86, %1, %cst_52 {dimension_numbers = #tpu.dot_dimension_numbers<[1], [0], [0], [1], [0, 0, 1, 1], [], []>} : vector<2x16xf32>, vector<16x16xf32>, vector<2x16xf32> -> vector<2x16xf32>
    %90 = arith.addf %88, %89 : vector<2x16xf32>
    %91 = math.tanh %90 : vector<2x16xf32>
    %c12_53 = arith.constant 12 : index
    %c0_54 = arith.constant 0 : index
    %92 = vector.load %arg10[%c12_53, %c0_54] : memref<16x16xf32, #tpu.memory_space<vmem>>, vector<2x16xf32>
    tpu.vector_store %arg10[%c12_53, %c0_54], %91 {strides = array<i32>} : memref<16x16xf32, #tpu.memory_space<vmem>>, vector<2x16xf32>,
    %93 = vector.extract_strided_slice %56 {offsets = [14, 0], sizes = [2, 16], strides = [1, 1]} : vector<16x16xf32> to vector<2x16xf32>
    %cst_55 = arith.constant dense<0.000000e+00> : vector<2x16xf32>
    %94 = tpu.matmul %91, %1, %cst_55 {dimension_numbers = #tpu.dot_dimension_numbers<[1], [0], [0], [1], [0, 0, 1, 1], [], []>} : vector<2x16xf32>, vector<16x16xf32>, vector<2x16xf32> -> vector<2x16xf32>
    %95 = arith.addf %93, %94 : vector<2x16xf32>
    %96 = math.tanh %95 : vector<2x16xf32>
    %c14_56 = arith.constant 14 : index
    %c0_57 = arith.constant 0 : index
    %97 = vector.load %arg10[%c14_56, %c0_57] : memref<16x16xf32, #tpu.memory_space<vmem>>, vector<2x16xf32>
    tpu.vector_store %arg10[%c14_56, %c0_57], %96 {strides = array<i32>} : memref<16x16xf32, #tpu.memory_space<vmem>>, vector<2x16xf32>,
    %c0_58 = arith.constant 0 : index
    %c0_59 = arith.constant 0 : index
    %98 = vector.load %arg10[%c0_58, %c0_59] : memref<16x16xf32, #tpu.memory_space<vmem>>, vector<16x16xf32>
    %c0_60 = arith.constant 0 : index
    %c0_61 = arith.constant 0 : index
    %99 = vector.load %arg7[%c0_60, %c0_61] : memref<16x5xf32, #tpu.memory_space<vmem>>, vector<16x5xf32>
    %cst_62 = arith.constant dense<0.000000e+00> : vector<16x5xf32>
    %100 = tpu.matmul %98, %99, %cst_62 {dimension_numbers = #tpu.dot_dimension_numbers<[1], [0], [0], [1], [0, 0, 1, 1], [], []>} : vector<16x16xf32>, vector<16x5xf32>, vector<16x5xf32> -> vector<16x5xf32>
    %c0_63 = arith.constant 0 : index
    %c0_64 = arith.constant 0 : index
    %101 = vector.load %arg8[%c0_63, %c0_64] : memref<1x5xf32, #tpu.memory_space<vmem>>, vector<1x5xf32>
    %102 = vector.broadcast %101 : vector<1x5xf32> to vector<16x5xf32>
    %103 = arith.addf %100, %102 : vector<16x5xf32>
    %c0_65 = arith.constant 0 : index
    %c0_66 = arith.constant 0 : index
    %104 = vector.load %arg9[%c0_65, %c0_66] : memref<16x5xf32, #tpu.memory_space<vmem>>, vector<16x5xf32>
    tpu.vector_store %arg9[%c0_65, %c0_66], %103 {strides = array<i32>} : memref<16x5xf32, #tpu.memory_space<vmem>>, vector<16x5xf32>,
    return
  }
}

</mosaic_0001>

<llo_original>
// kernel: tpu_custom_call.1
$region0: #{tpu_custom_call.1}
  #allocation0 [shape = 'u32[]', space=smem, size = 0x4, offset = 0x4, fixed_abs, tag = 'smem constant byte address 0x4 - core index']
  #allocation1 [shape = 'u32[144,128]{1,0:T(1,128)}', space=vmem, size = 0x12000, scoped, tag = 'internal scratch']
  #allocation2 [shape = 'f32[16,16]{1,0:T(8,128)}', space=vmem, size = 0x2000, scoped, tag = 'scratch operand']
  %s0 = inlined_call_operand.vmem [shape: f32[16,1], index: 0, kind: input, shape index: {}]
  %s1 = inlined_call_operand.hbm [shape: f32[1,16], index: 1, kind: input, shape index: {}]
  %s2 = inlined_call_operand.vmem [shape: f32[16,16], index: 2, kind: input, shape index: {}]
  %s3 = inlined_call_operand.hbm [shape: f32[1,16], index: 3, kind: input, shape index: {}]
  %s4 = inlined_call_operand.vmem [shape: f32[16,16], index: 4, kind: input, shape index: {}]
  %s5 = inlined_call_operand.vmem [shape: f32[16,16], index: 5, kind: input, shape index: {}]
  %s6 = inlined_call_operand.vmem [shape: f32[1,16], index: 6, kind: input, shape index: {}]
  %s7 = inlined_call_operand.vmem [shape: f32[16,5], index: 7, kind: input, shape index: {}]
  %s8 = inlined_call_operand.vmem [shape: f32[1,5], index: 8, kind: input, shape index: {}]
  %s9 = inlined_call_operand.vmem [shape: f32[16,5], index: 9, kind: output, shape index: {}]
  %s10 = sld [smem:[#allocation0]]
  $region54: #{tpu_custom_call.1} parent=0
    _
  %s12 = ssub.s32 1, %s10
  %s13 = scalar_select 0, %s12, %s10
  $region1: #{tpu_custom_call.1} parent=0
    #allocation3 [shape = 'u8[512]{0}', space=vmem, size = 0x400, scoped, tag = 'input window, operand 1, single buffered']
    #allocation4 [shape = 's32[1]{0}', space=sflag, size = 0x4, scoped, tag = 'scoped memory for tpu_custom_call.1']
    #allocation5 [shape = 'u8[512]{0}', space=vmem, size = 0x400, scoped, tag = 'input window, operand 3, single buffered']
    #allocation6 [shape = 's32[1]{0}', space=sflag, size = 0x4, scoped, tag = 'scoped memory for tpu_custom_call.1']
    %14 = vsyncpa [#allocation4], 0
    %15 = vsyncpa [#allocation6], 0
    // Predicated region
    $region2: #{tpu_custom_call.1} parent=1 // pred_check
      _
    $region3: #{tpu_custom_call.1} parent=1 // pred_check_branch
      %17 = sbr.rel (0) target = $region5
    $region4: #{tpu_custom_call.1} parent=1 // pred_region
      _
    $region5: #{tpu_custom_call.1} parent=1 // pred_fallthru
      _
    // Predicated region
    $region6: #{tpu_custom_call.1} parent=1 // pred_check
      _
    $region7: #{tpu_custom_call.1} parent=1 // pred_check_branch
      %19 = sbr.rel (0) target = $region9
    $region8: #{tpu_custom_call.1} parent=1 // pred_region
      %s21 = ssub.s32 16, 16
      %22 = vsyncadd [#allocation4], %s21
      %s24 = sshll.u32 [#allocation3], 4
      %s25 = int_to_ptr.vmem [resolvable:$true] %s24
      %27 = dma.hbm_to_vmem [thread:$0]  %s1, 16, %s25, [#allocation4]
    $region9: #{tpu_custom_call.1} parent=1 // pred_fallthru
      _
    // Predicated region
    $region10: #{tpu_custom_call.1} parent=1 // pred_check
      _
    $region11: #{tpu_custom_call.1} parent=1 // pred_check_branch
      %29 = sbr.rel (0) target = $region13
    $region12: #{tpu_custom_call.1} parent=1 // pred_region
      _
    $region13: #{tpu_custom_call.1} parent=1 // pred_fallthru
      _
    // Predicated region
    $region14: #{tpu_custom_call.1} parent=1 // pred_check
      _
    $region15: #{tpu_custom_call.1} parent=1 // pred_check_branch
      %31 = sbr.rel (0) target = $region17
    $region16: #{tpu_custom_call.1} parent=1 // pred_region
      %s33 = ssub.s32 16, 16
      %34 = vsyncadd [#allocation6], %s33
      %s36 = sshll.u32 [#allocation5], 4
      %s37 = int_to_ptr.vmem [resolvable:$true] %s36
      %39 = dma.hbm_to_vmem [thread:$0]  %s3, 16, %s37, [#allocation6]
    $region17: #{tpu_custom_call.1} parent=1 // pred_fallthru
      _
    // Predicated region
    $region18: #{tpu_custom_call.1} parent=1 // pred_check
      _
    $region19: #{tpu_custom_call.1} parent=1 // pred_check_branch
      %41 = sbr.rel (0) target = $region21
    $region20: #{tpu_custom_call.1} parent=1 // pred_region
      _
    $region21: #{tpu_custom_call.1} parent=1 // pred_fallthru
      _
    // Predicated region
    $region22: #{tpu_custom_call.1} parent=1 // pred_check
      _
    $region23: #{tpu_custom_call.1} parent=1 // pred_check_branch
      %43 = sbr.rel (0) target = $region25
    $region24: #{tpu_custom_call.1} parent=1 // pred_region
      _
    $region25: #{tpu_custom_call.1} parent=1 // pred_fallthru
      _
    // Predicated region
    $region26: #{tpu_custom_call.1} parent=1 // pred_check
      _
    $region27: #{tpu_custom_call.1} parent=1 // pred_check_branch
      %45 = sbr.rel (0) target = $region29
    $region28: #{tpu_custom_call.1} parent=1 // pred_region
      _
    $region29: #{tpu_custom_call.1} parent=1 // pred_fallthru
      _
    // Predicated region
    $region30: #{tpu_custom_call.1} parent=1 // pred_check
      _
    $region31: #{tpu_custom_call.1} parent=1 // pred_check_branch
      %47 = sbr.rel (0) target = $region33
    $region32: #{tpu_custom_call.1} parent=1 // pred_region
      _
    $region33: #{tpu_custom_call.1} parent=1 // pred_fallthru
      _
    // Predicated region
    $region34: #{tpu_custom_call.1} parent=1 // pred_check
      _
    $region35: #{tpu_custom_call.1} parent=1 // pred_check_branch
      %49 = sbr.rel (0) target = $region37
    $region36: #{tpu_custom_call.1} parent=1 // pred_region
      _
    $region37: #{tpu_custom_call.1} parent=1 // pred_fallthru
      _
    // Predicated region
    $region38: #{tpu_custom_call.1} parent=1 // pred_check
      _
    $region39: #{tpu_custom_call.1} parent=1 // pred_check_branch
      %51 = sbr.rel (0) target = $region41
    $region40: #{tpu_custom_call.1} parent=1 // pred_region
      %52 = dma.done [#allocation4], 16
    $region41: #{tpu_custom_call.1} parent=1 // pred_fallthru
      _
    // Predicated region
    $region42: #{tpu_custom_call.1} parent=1 // pred_check
      _
    $region43: #{tpu_custom_call.1} parent=1 // pred_check_branch
      %54 = sbr.rel (0) target = $region45
    $region44: #{tpu_custom_call.1} parent=1 // pred_region
      %55 = dma.done [#allocation6], 16
    $region45: #{tpu_custom_call.1} parent=1 // pred_fallthru
      _
    %v56 = vld [vmem:[%s2] sm:$0xff]
    %v57 = vld [vmem:[%s2 + $0x8] sm:$0xff]
    %v58 = vld [vmem:[%s5] sm:$0xff]
    %v59 = vld [vmem:[%s5 + $0x8] sm:$0xff]
    %v60 = vld [vmem:[%s0] sm:$0xff]
    %v61 = vld [vmem:[%s0 + $0x8] sm:$0xff]
    %v62 = vld [vmem:[#allocation3] sm:$0x1]
    %64 = vset.pattern.permute.xlu0 0
    %65 = vperm.xlu0 %64, %v60
    %v66 = vpop.permute.xlu0 %65
    %69 = vset.pattern.permute.xlu0 0
    %70 = vperm.xlu0 %69, %v61
    %v71 = vpop.permute.xlu0 %70
    %v74 = vlaneseq
    %v75 = vshrl.u32 %v74, 7
    %v76 = vsub.s32 0, %v75
    %v77 = vrot.slane %v62, %v76
    %v79 = vmul.f32 %v66, %v77
    %v80 = vmul.f32 %v71, %v77
    %v81 = vld [vmem:[#allocation5] sm:$0x1]
    %v83 = vlaneseq
    %v84 = vshrl.u32 %v83, 7
    %v85 = vsub.s32 0, %v84
    %v86 = vrot.slane %v81, %v85
    %v88 = vadd.f32 %v79, %v86
    %v89 = vadd.f32 %v80, %v86
    %vm90 = vcmask 130048
    %v92 = vsel %vm90, 0.0, 0
    %94 = vmatprep.subr.mxu0 0.0
    %95 = vmatpush1.msra.mxu0 %v56
    %96 = vmatprep.subr.mxu0 0.0
    %97 = vmatpush1.msra.mxu0 %v57
    %98 = vmatprep.subr.mxu0 0.0
    %99 = vmatpush1.msra.mxu0 0.0
    %100 = vmatprep.subr.mxu0 0.0
    %101 = vmatpush1.msra.mxu0 0.0
    %102 = vmatprep.subr.mxu0 0.0
    %103 = vmatpush1.msra.mxu0 0.0
    %104 = vmatprep.subr.mxu0 0.0
    %105 = vmatpush1.msra.mxu0 0.0
    %106 = vmatprep.subr.mxu0 0.0
    %107 = vmatpush1.msra.mxu0 0.0
    %108 = vmatprep.subr.mxu0 0.0
    %109 = vmatpush1.msra.mxu0 0.0
    %110 = vmatprep.subr.mxu0 0.0
    %111 = vmatpush1.msra.mxu0 0.0
    %112 = vmatprep.subr.mxu0 0.0
    %113 = vmatpush1.msra.mxu0 0.0
    %114 = vmatprep.subr.mxu0 0.0
    %115 = vmatpush1.msra.mxu0 0.0
    %116 = vmatprep.subr.mxu0 0.0
    %117 = vmatpush1.msra.mxu0 0.0
    %118 = vmatprep.subr.mxu0 0.0
    %119 = vmatpush1.msra.mxu0 0.0
    %120 = vmatprep.subr.mxu0 0.0
    %121 = vmatpush1.msra.mxu0 0.0
    %122 = vmatprep.subr.mxu0 0.0
    %123 = vmatpush1.msra.mxu0 0.0
    %124 = vmatprep.subr.mxu0 0.0
    %125 = vmatpush1.msra.mxu0 0.0
    %126 = vmatprep.subr.mxu0 0.0
    %127 = vmatpush1.msra.mxu0 0.0
    %128 = vmatprep.subr.mxu0 0.0
    %129 = vmatpush1.msra.mxu0 0.0
    %130 = vmatprep.subr.mxu0 0.0
    %131 = vmatpush1.msra.mxu0 0.0
    %132 = vmatprep.subr.mxu0 0.0
    %133 = vmatpush1.msra.mxu0 0.0
    %134 = vmatprep.subr.mxu0 0.0
    %135 = vmatpush1.msra.mxu0 0.0
    %136 = vmatprep.subr.mxu0 0.0
    %137 = vmatpush1.msra.mxu0 0.0
    %138 = vmatprep.subr.mxu0 0.0
    %139 = vmatpush1.msra.mxu0 0.0
    %140 = vmatprep.subr.mxu0 0.0
    %141 = vmatpush1.msra.mxu0 0.0
    %142 = vmatprep.subr.mxu0 0.0
    %143 = vmatpush1.msra.mxu0 0.0
    %144 = vmatprep.subr.mxu0 0.0
    %145 = vmatpush1.msra.mxu0 0.0
    %146 = vmatprep.subr.mxu0 0.0
    %147 = vmatpush1.msra.mxu0 0.0
    %148 = vmatprep.subr.mxu0 0.0
    %149 = vmatpush1.msra.mxu0 0.0
    %150 = vmatprep.subr.mxu0 0.0
    %151 = vmatpush1.msra.mxu0 0.0
    %152 = vmatprep.subr.mxu0 0.0
    %153 = vmatpush1.msra.mxu0 0.0
    %154 = vmatprep.subr.mxu0 0.0
    %155 = vmatpush1.msra.mxu0 0.0
    %156 = vmatprep.subr.mxu0 0.0
    %157 = vmatpush1.msra.mxu0 0.0
    %158 = vmatprep.mubr.f32.mxu0 0.0
    %159 = vmatmul.mubr.f32.gmra.mrb[0].mxu0 %v92
    %v160 = vpop.f32.mrb[0].mxu0
    %v161 = vadd.f32 0.0, %v160
    %v162 = vpop.f32.mrb[0].mxu0
    %163 = vdwg.mxu0
    %v164 = vadd.f32 %v88, %v161
    %v165 = vtanh.pop %v164
    %vm166 = vcmask 123904
    %167 = vst.msk [vmem:[#allocation2] sm:$0x3] %vm166, %v165
    %v169 = vsel %vm90, %v165, 0
    %171 = vmatprep.subr.mxu0 0.0
    %172 = vmatpush1.msra.mxu0 %v56
    %173 = vmatprep.subr.mxu0 0.0
    %174 = vmatpush1.msra.mxu0 %v57
    %175 = vmatprep.subr.mxu0 0.0
    %176 = vmatpush1.msra.mxu0 0.0
    %177 = vmatprep.subr.mxu0 0.0
    %178 = vmatpush1.msra.mxu0 0.0
    %179 = vmatprep.subr.mxu0 0.0
    %180 = vmatpush1.msra.mxu0 0.0
    %181 = vmatprep.subr.mxu0 0.0
    %182 = vmatpush1.msra.mxu0 0.0
    %183 = vmatprep.subr.mxu0 0.0
    %184 = vmatpush1.msra.mxu0 0.0
    %185 = vmatprep.subr.mxu0 0.0
    %186 = vmatpush1.msra.mxu0 0.0
    %187 = vmatprep.subr.mxu0 0.0
    %188 = vmatpush1.msra.mxu0 0.0
    %189 = vmatprep.subr.mxu0 0.0
    %190 = vmatpush1.msra.mxu0 0.0
    %191 = vmatprep.subr.mxu0 0.0
    %192 = vmatpush1.msra.mxu0 0.0
    %193 = vmatprep.subr.mxu0 0.0
    %194 = vmatpush1.msra.mxu0 0.0
    %195 = vmatprep.subr.mxu0 0.0
    %196 = vmatpush1.msra.mxu0 0.0
    %197 = vmatprep.subr.mxu0 0.0
    %198 = vmatpush1.msra.mxu0 0.0
    %199 = vmatprep.subr.mxu0 0.0
    %200 = vmatpush1.msra.mxu0 0.0
    %201 = vmatprep.subr.mxu0 0.0
    %202 = vmatpush1.msra.mxu0 0.0
    %203 = vmatprep.subr.mxu0 0.0
    %204 = vmatpush1.msra.mxu0 0.0
    %205 = vmatprep.subr.mxu0 0.0
    %206 = vmatpush1.msra.mxu0 0.0
    %207 = vmatprep.subr.mxu0 0.0
    %208 = vmatpush1.msra.mxu0 0.0
    %209 = vmatprep.subr.mxu0 0.0
    %210 = vmatpush1.msra.mxu0 0.0
    %211 = vmatprep.subr.mxu0 0.0
    %212 = vmatpush1.msra.mxu0 0.0
    %213 = vmatprep.subr.mxu0 0.0
    %214 = vmatpush1.msra.mxu0 0.0
    %215 = vmatprep.subr.mxu0 0.0
    %216 = vmatpush1.msra.mxu0 0.0
    %217 = vmatprep.subr.mxu0 0.0
    %218 = vmatpush1.msra.mxu0 0.0
    %219 = vmatprep.subr.mxu0 0.0
    %220 = vmatpush1.msra.mxu0 0.0
    %221 = vmatprep.subr.mxu0 0.0
    %222 = vmatpush1.msra.mxu0 0.0
    %223 = vmatprep.subr.mxu0 0.0
    %224 = vmatpush1.msra.mxu0 0.0
    %225 = vmatprep.subr.mxu0 0.0
    %226 = vmatpush1.msra.mxu0 0.0
    %227 = vmatprep.subr.mxu0 0.0
    %228 = vmatpush1.msra.mxu0 0.0
    %229 = vmatprep.subr.mxu0 0.0
    %230 = vmatpush1.msra.mxu0 0.0
    %231 = vmatprep.subr.mxu0 0.0
    %232 = vmatpush1.msra.mxu0 0.0
    %233 = vmatprep.subr.mxu0 0.0
    %234 = vmatpush1.msra.mxu0 0.0
    %235 = vmatprep.mubr.f32.mxu0 0.0
    %236 = vmatmul.mubr.f32.gmra.mrb[0].mxu0 %v169
    %v237 = vpop.f32.mrb[0].mxu0
    %v238 = vadd.f32 0.0, %v237
    %v239 = vpop.f32.mrb[0].mxu0
    %240 = vdwg.mxu0
    %v242 = vrot.slane %v238, 6
    %v244 = vadd.f32 %v88, %v242
    %v245 = vtanh.pop %v244
    %vm246 = vcmask 125954
    %247 = vst.msk [vmem:[#allocation2] sm:$0xc] %vm246, %v245
    %v249 = vrot.slane %v245, 2
    %v250 = vsel %vm90, %v249, 0
    %252 = vmatprep.subr.mxu0 0.0
    %253 = vmatpush1.msra.mxu0 %v56
    %254 = vmatprep.subr.mxu0 0.0
    %255 = vmatpush1.msra.mxu0 %v57
    %256 = vmatprep.subr.mxu0 0.0
    %257 = vmatpush1.msra.mxu0 0.0
    %258 = vmatprep.subr.mxu0 0.0
    %259 = vmatpush1.msra.mxu0 0.0
    %260 = vmatprep.subr.mxu0 0.0
    %261 = vmatpush1.msra.mxu0 0.0
    %262 = vmatprep.subr.mxu0 0.0
    %263 = vmatpush1.msra.mxu0 0.0
    %264 = vmatprep.subr.mxu0 0.0
    %265 = vmatpush1.msra.mxu0 0.0
    %266 = vmatprep.subr.mxu0 0.0
    %267 = vmatpush1.msra.mxu0 0.0
    %268 = vmatprep.subr.mxu0 0.0
    %269 = vmatpush1.msra.mxu0 0.0
    %270 = vmatprep.subr.mxu0 0.0
    %271 = vmatpush1.msra.mxu0 0.0
    %272 = vmatprep.subr.mxu0 0.0
    %273 = vmatpush1.msra.mxu0 0.0
    %274 = vmatprep.subr.mxu0 0.0
    %275 = vmatpush1.msra.mxu0 0.0
    %276 = vmatprep.subr.mxu0 0.0
    %277 = vmatpush1.msra.mxu0 0.0
    %278 = vmatprep.subr.mxu0 0.0
    %279 = vmatpush1.msra.mxu0 0.0
    %280 = vmatprep.subr.mxu0 0.0
    %281 = vmatpush1.msra.mxu0 0.0
    %282 = vmatprep.subr.mxu0 0.0
    %283 = vmatpush1.msra.mxu0 0.0
    %284 = vmatprep.subr.mxu0 0.0
    %285 = vmatpush1.msra.mxu0 0.0
    %286 = vmatprep.subr.mxu0 0.0
    %287 = vmatpush1.msra.mxu0 0.0
    %288 = vmatprep.subr.mxu0 0.0
    %289 = vmatpush1.msra.mxu0 0.0
    %290 = vmatprep.subr.mxu0 0.0
    %291 = vmatpush1.msra.mxu0 0.0
    %292 = vmatprep.subr.mxu0 0.0
    %293 = vmatpush1.msra.mxu0 0.0
    %294 = vmatprep.subr.mxu0 0.0
    %295 = vmatpush1.msra.mxu0 0.0
    %296 = vmatprep.subr.mxu0 0.0
    %297 = vmatpush1.msra.mxu0 0.0
    %298 = vmatprep.subr.mxu0 0.0
    %299 = vmatpush1.msra.mxu0 0.0
    %300 = vmatprep.subr.mxu0 0.0
    %301 = vmatpush1.msra.mxu0 0.0
    %302 = vmatprep.subr.mxu0 0.0
    %303 = vmatpush1.msra.mxu0 0.0
    %304 = vmatprep.subr.mxu0 0.0
    %305 = vmatpush1.msra.mxu0 0.0
    %306 = vmatprep.subr.mxu0 0.0
    %307 = vmatpush1.msra.mxu0 0.0
    %308 = vmatprep.subr.mxu0 0.0
    %309 = vmatpush1.msra.mxu0 0.0
    %310 = vmatprep.subr.mxu0 0.0
    %311 = vmatpush1.msra.mxu0 0.0
    %312 = vmatprep.subr.mxu0 0.0
    %313 = vmatpush1.msra.mxu0 0.0
    %314 = vmatprep.subr.mxu0 0.0
    %315 = vmatpush1.msra.mxu0 0.0
    %316 = vmatprep.mubr.f32.mxu0 0.0
    %317 = vmatmul.mubr.f32.gmra.mrb[0].mxu0 %v250
    %v318 = vpop.f32.mrb[0].mxu0
    %v319 = vadd.f32 0.0, %v318
    %v320 = vpop.f32.mrb[0].mxu0
    %321 = vdwg.mxu0
    %v323 = vrot.slane %v319, 4
    %v325 = vadd.f32 %v88, %v323
    %v326 = vtanh.pop %v325
    %vm327 = vcmask 128004
    %328 = vst.msk [vmem:[#allocation2] sm:$0x30] %vm327, %v326
    %v330 = vrot.slane %v326, 4
    %v331 = vsel %vm90, %v330, 0
    %333 = vmatprep.subr.mxu0 0.0
    %334 = vmatpush1.msra.mxu0 %v56
    %335 = vmatprep.subr.mxu0 0.0
    %336 = vmatpush1.msra.mxu0 %v57
    %337 = vmatprep.subr.mxu0 0.0
    %338 = vmatpush1.msra.mxu0 0.0
    %339 = vmatprep.subr.mxu0 0.0
    %340 = vmatpush1.msra.mxu0 0.0
    %341 = vmatprep.subr.mxu0 0.0
    %342 = vmatpush1.msra.mxu0 0.0
    %343 = vmatprep.subr.mxu0 0.0
    %344 = vmatpush1.msra.mxu0 0.0
    %345 = vmatprep.subr.mxu0 0.0
    %346 = vmatpush1.msra.mxu0 0.0
    %347 = vmatprep.subr.mxu0 0.0
    %348 = vmatpush1.msra.mxu0 0.0
    %349 = vmatprep.subr.mxu0 0.0
    %350 = vmatpush1.msra.mxu0 0.0
    %351 = vmatprep.subr.mxu0 0.0
    %352 = vmatpush1.msra.mxu0 0.0
    %353 = vmatprep.subr.mxu0 0.0
    %354 = vmatpush1.msra.mxu0 0.0
    %355 = vmatprep.subr.mxu0 0.0
    %356 = vmatpush1.msra.mxu0 0.0
    %357 = vmatprep.subr.mxu0 0.0
    %358 = vmatpush1.msra.mxu0 0.0
    %359 = vmatprep.subr.mxu0 0.0
    %360 = vmatpush1.msra.mxu0 0.0
    %361 = vmatprep.subr.mxu0 0.0
    %362 = vmatpush1.msra.mxu0 0.0
    %363 = vmatprep.subr.mxu0 0.0
    %364 = vmatpush1.msra.mxu0 0.0
    %365 = vmatprep.subr.mxu0 0.0
    %366 = vmatpush1.msra.mxu0 0.0
    %367 = vmatprep.subr.mxu0 0.0
    %368 = vmatpush1.msra.mxu0 0.0
    %369 = vmatprep.subr.mxu0 0.0
    %370 = vmatpush1.msra.mxu0 0.0
    %371 = vmatprep.subr.mxu0 0.0
    %372 = vmatpush1.msra.mxu0 0.0
    %373 = vmatprep.subr.mxu0 0.0
    %374 = vmatpush1.msra.mxu0 0.0
    %375 = vmatprep.subr.mxu0 0.0
    %376 = vmatpush1.msra.mxu0 0.0
    %377 = vmatprep.subr.mxu0 0.0
    %378 = vmatpush1.msra.mxu0 0.0
    %379 = vmatprep.subr.mxu0 0.0
    %380 = vmatpush1.msra.mxu0 0.0
    %381 = vmatprep.subr.mxu0 0.0
    %382 = vmatpush1.msra.mxu0 0.0
    %383 = vmatprep.subr.mxu0 0.0
    %384 = vmatpush1.msra.mxu0 0.0
    %385 = vmatprep.subr.mxu0 0.0
    %386 = vmatpush1.msra.mxu0 0.0
    %387 = vmatprep.subr.mxu0 0.0
    %388 = vmatpush1.msra.mxu0 0.0
    %389 = vmatprep.subr.mxu0 0.0
    %390 = vmatpush1.msra.mxu0 0.0
    %391 = vmatprep.subr.mxu0 0.0
    %392 = vmatpush1.msra.mxu0 0.0
    %393 = vmatprep.subr.mxu0 0.0
    %394 = vmatpush1.msra.mxu0 0.0
    %395 = vmatprep.subr.mxu0 0.0
    %396 = vmatpush1.msra.mxu0 0.0
    %397 = vmatprep.mubr.f32.mxu0 0.0
    %398 = vmatmul.mubr.f32.gmra.mrb[0].mxu0 %v331
    %v399 = vpop.f32.mrb[0].mxu0
    %v400 = vadd.f32 0.0, %v399
    %v401 = vpop.f32.mrb[0].mxu0
    %402 = vdwg.mxu0
    %v404 = vrot.slane %v400, 2
    %v406 = vadd.f32 %v88, %v404
    %v407 = vtanh.pop %v406
    %vm408 = vcmask 130054
    %409 = vst.msk [vmem:[#allocation2] sm:$0xc0] %vm408, %v407
    %v411 = vrot.slane %v407, 6
    %v412 = vsel %vm90, %v411, 0
    %414 = vmatprep.subr.mxu0 0.0
    %415 = vmatpush1.msra.mxu0 %v56
    %416 = vmatprep.subr.mxu0 0.0
    %417 = vmatpush1.msra.mxu0 %v57
    %418 = vmatprep.subr.mxu0 0.0
    %419 = vmatpush1.msra.mxu0 0.0
    %420 = vmatprep.subr.mxu0 0.0
    %421 = vmatpush1.msra.mxu0 0.0
    %422 = vmatprep.subr.mxu0 0.0
    %423 = vmatpush1.msra.mxu0 0.0
    %424 = vmatprep.subr.mxu0 0.0
    %425 = vmatpush1.msra.mxu0 0.0
    %426 = vmatprep.subr.mxu0 0.0
    %427 = vmatpush1.msra.mxu0 0.0
    %428 = vmatprep.subr.mxu0 0.0
    %429 = vmatpush1.msra.mxu0 0.0
    %430 = vmatprep.subr.mxu0 0.0
    %431 = vmatpush1.msra.mxu0 0.0
    %432 = vmatprep.subr.mxu0 0.0
    %433 = vmatpush1.msra.mxu0 0.0
    %434 = vmatprep.subr.mxu0 0.0
    %435 = vmatpush1.msra.mxu0 0.0
    %436 = vmatprep.subr.mxu0 0.0
    %437 = vmatpush1.msra.mxu0 0.0
    %438 = vmatprep.subr.mxu0 0.0
    %439 = vmatpush1.msra.mxu0 0.0
    %440 = vmatprep.subr.mxu0 0.0
    %441 = vmatpush1.msra.mxu0 0.0
    %442 = vmatprep.subr.mxu0 0.0
    %443 = vmatpush1.msra.mxu0 0.0
    %444 = vmatprep.subr.mxu0 0.0
    %445 = vmatpush1.msra.mxu0 0.0
    %446 = vmatprep.subr.mxu0 0.0
    %447 = vmatpush1.msra.mxu0 0.0
    %448 = vmatprep.subr.mxu0 0.0
    %449 = vmatpush1.msra.mxu0 0.0
    %450 = vmatprep.subr.mxu0 0.0
    %451 = vmatpush1.msra.mxu0 0.0
    %452 = vmatprep.subr.mxu0 0.0
    %453 = vmatpush1.msra.mxu0 0.0
    %454 = vmatprep.subr.mxu0 0.0
    %455 = vmatpush1.msra.mxu0 0.0
    %456 = vmatprep.subr.mxu0 0.0
    %457 = vmatpush1.msra.mxu0 0.0
    %458 = vmatprep.subr.mxu0 0.0
    %459 = vmatpush1.msra.mxu0 0.0
    %460 = vmatprep.subr.mxu0 0.0
    %461 = vmatpush1.msra.mxu0 0.0
    %462 = vmatprep.subr.mxu0 0.0
    %463 = vmatpush1.msra.mxu0 0.0
    %464 = vmatprep.subr.mxu0 0.0
    %465 = vmatpush1.msra.mxu0 0.0
    %466 = vmatprep.subr.mxu0 0.0
    %467 = vmatpush1.msra.mxu0 0.0
    %468 = vmatprep.subr.mxu0 0.0
    %469 = vmatpush1.msra.mxu0 0.0
    %470 = vmatprep.subr.mxu0 0.0
    %471 = vmatpush1.msra.mxu0 0.0
    %472 = vmatprep.subr.mxu0 0.0
    %473 = vmatpush1.msra.mxu0 0.0
    %474 = vmatprep.subr.mxu0 0.0
    %475 = vmatpush1.msra.mxu0 0.0
    %476 = vmatprep.subr.mxu0 0.0
    %477 = vmatpush1.msra.mxu0 0.0
    %478 = vmatprep.mubr.f32.mxu0 0.0
    %479 = vmatmul.mubr.f32.gmra.mrb[0].mxu0 %v412
    %v480 = vpop.f32.mrb[0].mxu0
    %v481 = vadd.f32 0.0, %v480
    %v482 = vpop.f32.mrb[0].mxu0
    %483 = vdwg.mxu0
    %v484 = vadd.f32 %v89, %v481
    %v485 = vtanh.pop %v484
    %486 = vst.msk [vmem:[#allocation2 + $0x8] sm:$0x3] %vm166, %v485
    %v488 = vsel %vm90, %v485, 0
    %490 = vmatprep.subr.mxu0 0.0
    %491 = vmatpush1.msra.mxu0 %v56
    %492 = vmatprep.subr.mxu0 0.0
    %493 = vmatpush1.msra.mxu0 %v57
    %494 = vmatprep.subr.mxu0 0.0
    %495 = vmatpush1.msra.mxu0 0.0
    %496 = vmatprep.subr.mxu0 0.0
    %497 = vmatpush1.msra.mxu0 0.0
    %498 = vmatprep.subr.mxu0 0.0
    %499 = vmatpush1.msra.mxu0 0.0
    %500 = vmatprep.subr.mxu0 0.0
    %501 = vmatpush1.msra.mxu0 0.0
    %502 = vmatprep.subr.mxu0 0.0
    %503 = vmatpush1.msra.mxu0 0.0
    %504 = vmatprep.subr.mxu0 0.0
    %505 = vmatpush1.msra.mxu0 0.0
    %506 = vmatprep.subr.mxu0 0.0
    %507 = vmatpush1.msra.mxu0 0.0
    %508 = vmatprep.subr.mxu0 0.0
    %509 = vmatpush1.msra.mxu0 0.0
    %510 = vmatprep.subr.mxu0 0.0
    %511 = vmatpush1.msra.mxu0 0.0
    %512 = vmatprep.subr.mxu0 0.0
    %513 = vmatpush1.msra.mxu0 0.0
    %514 = vmatprep.subr.mxu0 0.0
    %515 = vmatpush1.msra.mxu0 0.0
    %516 = vmatprep.subr.mxu0 0.0
    %517 = vmatpush1.msra.mxu0 0.0
    %518 = vmatprep.subr.mxu0 0.0
    %519 = vmatpush1.msra.mxu0 0.0
    %520 = vmatprep.subr.mxu0 0.0
    %521 = vmatpush1.msra.mxu0 0.0
    %522 = vmatprep.subr.mxu0 0.0
    %523 = vmatpush1.msra.mxu0 0.0
    %524 = vmatprep.subr.mxu0 0.0
    %525 = vmatpush1.msra.mxu0 0.0
    %526 = vmatprep.subr.mxu0 0.0
    %527 = vmatpush1.msra.mxu0 0.0
    %528 = vmatprep.subr.mxu0 0.0
    %529 = vmatpush1.msra.mxu0 0.0
    %530 = vmatprep.subr.mxu0 0.0
    %531 = vmatpush1.msra.mxu0 0.0
    %532 = vmatprep.subr.mxu0 0.0
    %533 = vmatpush1.msra.mxu0 0.0
    %534 = vmatprep.subr.mxu0 0.0
    %535 = vmatpush1.msra.mxu0 0.0
    %536 = vmatprep.subr.mxu0 0.0
    %537 = vmatpush1.msra.mxu0 0.0
    %538 = vmatprep.subr.mxu0 0.0
    %539 = vmatpush1.msra.mxu0 0.0
    %540 = vmatprep.subr.mxu0 0.0
    %541 = vmatpush1.msra.mxu0 0.0
    %542 = vmatprep.subr.mxu0 0.0
    %543 = vmatpush1.msra.mxu0 0.0
    %544 = vmatprep.subr.mxu0 0.0
    %545 = vmatpush1.msra.mxu0 0.0
    %546 = vmatprep.subr.mxu0 0.0
    %547 = vmatpush1.msra.mxu0 0.0
    %548 = vmatprep.subr.mxu0 0.0
    %549 = vmatpush1.msra.mxu0 0.0
    %550 = vmatprep.subr.mxu0 0.0
    %551 = vmatpush1.msra.mxu0 0.0
    %552 = vmatprep.subr.mxu0 0.0
    %553 = vmatpush1.msra.mxu0 0.0
    %554 = vmatprep.mubr.f32.mxu0 0.0
    %555 = vmatmul.mubr.f32.gmra.mrb[0].mxu0 %v488
    %v556 = vpop.f32.mrb[0].mxu0
    %v557 = vadd.f32 0.0, %v556
    %v558 = vpop.f32.mrb[0].mxu0
    %559 = vdwg.mxu0
    %v561 = vrot.slane %v557, 6
    %v563 = vadd.f32 %v89, %v561
    %v564 = vtanh.pop %v563
    %565 = vst.msk [vmem:[#allocation2 + $0x8] sm:$0xc] %vm246, %v564
    %v567 = vrot.slane %v564, 2
    %v568 = vsel %vm90, %v567, 0
    %570 = vmatprep.subr.mxu0 0.0
    %571 = vmatpush1.msra.mxu0 %v56
    %572 = vmatprep.subr.mxu0 0.0
    %573 = vmatpush1.msra.mxu0 %v57
    %574 = vmatprep.subr.mxu0 0.0
    %575 = vmatpush1.msra.mxu0 0.0
    %576 = vmatprep.subr.mxu0 0.0
    %577 = vmatpush1.msra.mxu0 0.0
    %578 = vmatprep.subr.mxu0 0.0
    %579 = vmatpush1.msra.mxu0 0.0
    %580 = vmatprep.subr.mxu0 0.0
    %581 = vmatpush1.msra.mxu0 0.0
    %582 = vmatprep.subr.mxu0 0.0
    %583 = vmatpush1.msra.mxu0 0.0
    %584 = vmatprep.subr.mxu0 0.0
    %585 = vmatpush1.msra.mxu0 0.0
    %586 = vmatprep.subr.mxu0 0.0
    %587 = vmatpush1.msra.mxu0 0.0
    %588 = vmatprep.subr.mxu0 0.0
    %589 = vmatpush1.msra.mxu0 0.0
    %590 = vmatprep.subr.mxu0 0.0
    %591 = vmatpush1.msra.mxu0 0.0
    %592 = vmatprep.subr.mxu0 0.0
    %593 = vmatpush1.msra.mxu0 0.0
    %594 = vmatprep.subr.mxu0 0.0
    %595 = vmatpush1.msra.mxu0 0.0
    %596 = vmatprep.subr.mxu0 0.0
    %597 = vmatpush1.msra.mxu0 0.0
    %598 = vmatprep.subr.mxu0 0.0
    %599 = vmatpush1.msra.mxu0 0.0
    %600 = vmatprep.subr.mxu0 0.0
    %601 = vmatpush1.msra.mxu0 0.0
    %602 = vmatprep.subr.mxu0 0.0
    %603 = vmatpush1.msra.mxu0 0.0
    %604 = vmatprep.subr.mxu0 0.0
    %605 = vmatpush1.msra.mxu0 0.0
    %606 = vmatprep.subr.mxu0 0.0
    %607 = vmatpush1.msra.mxu0 0.0
    %608 = vmatprep.subr.mxu0 0.0
    %609 = vmatpush1.msra.mxu0 0.0
    %610 = vmatprep.subr.mxu0 0.0
    %611 = vmatpush1.msra.mxu0 0.0
    %612 = vmatprep.subr.mxu0 0.0
    %613 = vmatpush1.msra.mxu0 0.0
    %614 = vmatprep.subr.mxu0 0.0
    %615 = vmatpush1.msra.mxu0 0.0
    %616 = vmatprep.subr.mxu0 0.0
    %617 = vmatpush1.msra.mxu0 0.0
    %618 = vmatprep.subr.mxu0 0.0
    %619 = vmatpush1.msra.mxu0 0.0
    %620 = vmatprep.subr.mxu0 0.0
    %621 = vmatpush1.msra.mxu0 0.0
    %622 = vmatprep.subr.mxu0 0.0
    %623 = vmatpush1.msra.mxu0 0.0
    %624 = vmatprep.subr.mxu0 0.0
    %625 = vmatpush1.msra.mxu0 0.0
    %626 = vmatprep.subr.mxu0 0.0
    %627 = vmatpush1.msra.mxu0 0.0
    %628 = vmatprep.subr.mxu0 0.0
    %629 = vmatpush1.msra.mxu0 0.0
    %630 = vmatprep.subr.mxu0 0.0
    %631 = vmatpush1.msra.mxu0 0.0
    %632 = vmatprep.subr.mxu0 0.0
    %633 = vmatpush1.msra.mxu0 0.0
    %634 = vmatprep.mubr.f32.mxu0 0.0
    %635 = vmatmul.mubr.f32.gmra.mrb[0].mxu0 %v568
    %v636 = vpop.f32.mrb[0].mxu0
    %v637 = vadd.f32 0.0, %v636
    %v638 = vpop.f32.mrb[0].mxu0
    %639 = vdwg.mxu0
    %v641 = vrot.slane %v637, 4
    %v643 = vadd.f32 %v89, %v641
    %v644 = vtanh.pop %v643
    %645 = vst.msk [vmem:[#allocation2 + $0x8] sm:$0x30] %vm327, %v644
    %v647 = vrot.slane %v644, 4
    %v648 = vsel %vm90, %v647, 0
    %650 = vmatprep.subr.mxu0 0.0
    %651 = vmatpush1.msra.mxu0 %v56
    %652 = vmatprep.subr.mxu0 0.0
    %653 = vmatpush1.msra.mxu0 %v57
    %654 = vmatprep.subr.mxu0 0.0
    %655 = vmatpush1.msra.mxu0 0.0
    %656 = vmatprep.subr.mxu0 0.0
    %657 = vmatpush1.msra.mxu0 0.0
    %658 = vmatprep.subr.mxu0 0.0
    %659 = vmatpush1.msra.mxu0 0.0
    %660 = vmatprep.subr.mxu0 0.0
    %661 = vmatpush1.msra.mxu0 0.0
    %662 = vmatprep.subr.mxu0 0.0
    %663 = vmatpush1.msra.mxu0 0.0
    %664 = vmatprep.subr.mxu0 0.0
    %665 = vmatpush1.msra.mxu0 0.0
    %666 = vmatprep.subr.mxu0 0.0
    %667 = vmatpush1.msra.mxu0 0.0
    %668 = vmatprep.subr.mxu0 0.0
    %669 = vmatpush1.msra.mxu0 0.0
    %670 = vmatprep.subr.mxu0 0.0
    %671 = vmatpush1.msra.mxu0 0.0
    %672 = vmatprep.subr.mxu0 0.0
    %673 = vmatpush1.msra.mxu0 0.0
    %674 = vmatprep.subr.mxu0 0.0
    %675 = vmatpush1.msra.mxu0 0.0
    %676 = vmatprep.subr.mxu0 0.0
    %677 = vmatpush1.msra.mxu0 0.0
    %678 = vmatprep.subr.mxu0 0.0
    %679 = vmatpush1.msra.mxu0 0.0
    %680 = vmatprep.subr.mxu0 0.0
    %681 = vmatpush1.msra.mxu0 0.0
    %682 = vmatprep.subr.mxu0 0.0
    %683 = vmatpush1.msra.mxu0 0.0
    %684 = vmatprep.subr.mxu0 0.0
    %685 = vmatpush1.msra.mxu0 0.0
    %686 = vmatprep.subr.mxu0 0.0
    %687 = vmatpush1.msra.mxu0 0.0
    %688 = vmatprep.subr.mxu0 0.0
    %689 = vmatpush1.msra.mxu0 0.0
    %690 = vmatprep.subr.mxu0 0.0
    %691 = vmatpush1.msra.mxu0 0.0
    %692 = vmatprep.subr.mxu0 0.0
    %693 = vmatpush1.msra.mxu0 0.0
    %694 = vmatprep.subr.mxu0 0.0
    %695 = vmatpush1.msra.mxu0 0.0
    %696 = vmatprep.subr.mxu0 0.0
    %697 = vmatpush1.msra.mxu0 0.0
    %698 = vmatprep.subr.mxu0 0.0
    %699 = vmatpush1.msra.mxu0 0.0
    %700 = vmatprep.subr.mxu0 0.0
    %701 = vmatpush1.msra.mxu0 0.0
    %702 = vmatprep.subr.mxu0 0.0
    %703 = vmatpush1.msra.mxu0 0.0
    %704 = vmatprep.subr.mxu0 0.0
    %705 = vmatpush1.msra.mxu0 0.0
    %706 = vmatprep.subr.mxu0 0.0
    %707 = vmatpush1.msra.mxu0 0.0
    %708 = vmatprep.subr.mxu0 0.0
    %709 = vmatpush1.msra.mxu0 0.0
    %710 = vmatprep.subr.mxu0 0.0
    %711 = vmatpush1.msra.mxu0 0.0
    %712 = vmatprep.subr.mxu0 0.0
    %713 = vmatpush1.msra.mxu0 0.0
    %714 = vmatprep.mubr.f32.mxu0 0.0
    %715 = vmatmul.mubr.f32.gmra.mrb[0].mxu0 %v648
    %v716 = vpop.f32.mrb[0].mxu0
    %v717 = vadd.f32 0.0, %v716
    %v718 = vpop.f32.mrb[0].mxu0
    %719 = vdwg.mxu0
    %v721 = vrot.slane %v717, 2
    %v723 = vadd.f32 %v89, %v721
    %v724 = vtanh.pop %v723
    %725 = vst.msk [vmem:[#allocation2 + $0x8] sm:$0xc0] %vm408, %v724
    %v726 = vld [vmem:[#allocation2] sm:$0xff]
    %v727 = vld [vmem:[#allocation2 + $0x8] sm:$0xff]
    %v728 = vld [vmem:[%s4] sm:$0xff]
    %v729 = vld [vmem:[%s4 + $0x8] sm:$0xff]
    %v730 = vld [vmem:[%s6] sm:$0x1]
    %v732 = vlaneseq
    %v733 = vshrl.u32 %v732, 7
    %v734 = vsub.s32 0, %v733
    %v735 = vrot.slane %v730, %v734
    %v738 = vsel %vm90, %v726, 0
    %v741 = vsel %vm90, %v727, 0
    %743 = vmatprep.subr.mxu0 0.0
    %744 = vmatpush1.msra.mxu0 %v728
    %745 = vmatprep.subr.mxu0 0.0
    %746 = vmatpush1.msra.mxu0 %v729
    %747 = vmatprep.subr.mxu0 0.0
    %748 = vmatpush1.msra.mxu0 0.0
    %749 = vmatprep.subr.mxu0 0.0
    %750 = vmatpush1.msra.mxu0 0.0
    %751 = vmatprep.subr.mxu0 0.0
    %752 = vmatpush1.msra.mxu0 0.0
    %753 = vmatprep.subr.mxu0 0.0
    %754 = vmatpush1.msra.mxu0 0.0
    %755 = vmatprep.subr.mxu0 0.0
    %756 = vmatpush1.msra.mxu0 0.0
    %757 = vmatprep.subr.mxu0 0.0
    %758 = vmatpush1.msra.mxu0 0.0
    %759 = vmatprep.subr.mxu0 0.0
    %760 = vmatpush1.msra.mxu0 0.0
    %761 = vmatprep.subr.mxu0 0.0
    %762 = vmatpush1.msra.mxu0 0.0
    %763 = vmatprep.subr.mxu0 0.0
    %764 = vmatpush1.msra.mxu0 0.0
    %765 = vmatprep.subr.mxu0 0.0
    %766 = vmatpush1.msra.mxu0 0.0
    %767 = vmatprep.subr.mxu0 0.0
    %768 = vmatpush1.msra.mxu0 0.0
    %769 = vmatprep.subr.mxu0 0.0
    %770 = vmatpush1.msra.mxu0 0.0
    %771 = vmatprep.subr.mxu0 0.0
    %772 = vmatpush1.msra.mxu0 0.0
    %773 = vmatprep.subr.mxu0 0.0
    %774 = vmatpush1.msra.mxu0 0.0
    %775 = vmatprep.subr.mxu0 0.0
    %776 = vmatpush1.msra.mxu0 0.0
    %777 = vmatprep.subr.mxu0 0.0
    %778 = vmatpush1.msra.mxu0 0.0
    %779 = vmatprep.subr.mxu0 0.0
    %780 = vmatpush1.msra.mxu0 0.0
    %781 = vmatprep.subr.mxu0 0.0
    %782 = vmatpush1.msra.mxu0 0.0
    %783 = vmatprep.subr.mxu0 0.0
    %784 = vmatpush1.msra.mxu0 0.0
    %785 = vmatprep.subr.mxu0 0.0
    %786 = vmatpush1.msra.mxu0 0.0
    %787 = vmatprep.subr.mxu0 0.0
    %788 = vmatpush1.msra.mxu0 0.0
    %789 = vmatprep.subr.mxu0 0.0
    %790 = vmatpush1.msra.mxu0 0.0
    %791 = vmatprep.subr.mxu0 0.0
    %792 = vmatpush1.msra.mxu0 0.0
    %793 = vmatprep.subr.mxu0 0.0
    %794 = vmatpush1.msra.mxu0 0.0
    %795 = vmatprep.subr.mxu0 0.0
    %796 = vmatpush1.msra.mxu0 0.0
    %797 = vmatprep.subr.mxu0 0.0
    %798 = vmatpush1.msra.mxu0 0.0
    %799 = vmatprep.subr.mxu0 0.0
    %800 = vmatpush1.msra.mxu0 0.0
    %801 = vmatprep.subr.mxu0 0.0
    %802 = vmatpush1.msra.mxu0 0.0
    %803 = vmatprep.subr.mxu0 0.0
    %804 = vmatpush1.msra.mxu0 0.0
    %805 = vmatprep.subr.mxu0 0.0
    %806 = vmatpush1.msra.mxu0 0.0
    %807 = vmatprep.mubr.f32.mxu0 0.0
    %808 = vmatmul.mubr.f32.gmra.mrb[0].mxu0 %v738
    %v809 = vpop.f32.mrb[0].mxu0
    %v810 = vadd.f32 %v735, %v809
    %v811 = vpop.f32.mrb[0].mxu0
    %812 = vmatprep.mubr.f32.mxu0 0.0
    %813 = vmatmul.mubr.f32.gmra.mrb[0].mxu0 %v741
    %v814 = vpop.f32.mrb[0].mxu0
    %v815 = vadd.f32 %v735, %v814
    %v816 = vpop.f32.mrb[0].mxu0
    %817 = vdwg.mxu0
    %818 = vmatprep.subr.mxu0 0.0
    %819 = vmatpush1.msra.mxu0 %v58
    %820 = vmatprep.subr.mxu0 0.0
    %821 = vmatpush1.msra.mxu0 %v59
    %822 = vmatprep.subr.mxu0 0.0
    %823 = vmatpush1.msra.mxu0 0.0
    %824 = vmatprep.subr.mxu0 0.0
    %825 = vmatpush1.msra.mxu0 0.0
    %826 = vmatprep.subr.mxu0 0.0
    %827 = vmatpush1.msra.mxu0 0.0
    %828 = vmatprep.subr.mxu0 0.0
    %829 = vmatpush1.msra.mxu0 0.0
    %830 = vmatprep.subr.mxu0 0.0
    %831 = vmatpush1.msra.mxu0 0.0
    %832 = vmatprep.subr.mxu0 0.0
    %833 = vmatpush1.msra.mxu0 0.0
    %834 = vmatprep.subr.mxu0 0.0
    %835 = vmatpush1.msra.mxu0 0.0
    %836 = vmatprep.subr.mxu0 0.0
    %837 = vmatpush1.msra.mxu0 0.0
    %838 = vmatprep.subr.mxu0 0.0
    %839 = vmatpush1.msra.mxu0 0.0
    %840 = vmatprep.subr.mxu0 0.0
    %841 = vmatpush1.msra.mxu0 0.0
    %842 = vmatprep.subr.mxu0 0.0
    %843 = vmatpush1.msra.mxu0 0.0
    %844 = vmatprep.subr.mxu0 0.0
    %845 = vmatpush1.msra.mxu0 0.0
    %846 = vmatprep.subr.mxu0 0.0
    %847 = vmatpush1.msra.mxu0 0.0
    %848 = vmatprep.subr.mxu0 0.0
    %849 = vmatpush1.msra.mxu0 0.0
    %850 = vmatprep.subr.mxu0 0.0
    %851 = vmatpush1.msra.mxu0 0.0
    %852 = vmatprep.subr.mxu0 0.0
    %853 = vmatpush1.msra.mxu0 0.0
    %854 = vmatprep.subr.mxu0 0.0
    %855 = vmatpush1.msra.mxu0 0.0
    %856 = vmatprep.subr.mxu0 0.0
    %857 = vmatpush1.msra.mxu0 0.0
    %858 = vmatprep.subr.mxu0 0.0
    %859 = vmatpush1.msra.mxu0 0.0
    %860 = vmatprep.subr.mxu0 0.0
    %861 = vmatpush1.msra.mxu0 0.0
    %862 = vmatprep.subr.mxu0 0.0
    %863 = vmatpush1.msra.mxu0 0.0
    %864 = vmatprep.subr.mxu0 0.0
    %865 = vmatpush1.msra.mxu0 0.0
    %866 = vmatprep.subr.mxu0 0.0
    %867 = vmatpush1.msra.mxu0 0.0
    %868 = vmatprep.subr.mxu0 0.0
    %869 = vmatpush1.msra.mxu0 0.0
    %870 = vmatprep.subr.mxu0 0.0
    %871 = vmatpush1.msra.mxu0 0.0
    %872 = vmatprep.subr.mxu0 0.0
    %873 = vmatpush1.msra.mxu0 0.0
    %874 = vmatprep.subr.mxu0 0.0
    %875 = vmatpush1.msra.mxu0 0.0
    %876 = vmatprep.subr.mxu0 0.0
    %877 = vmatpush1.msra.mxu0 0.0
    %878 = vmatprep.subr.mxu0 0.0
    %879 = vmatpush1.msra.mxu0 0.0
    %880 = vmatprep.subr.mxu0 0.0
    %881 = vmatpush1.msra.mxu0 0.0
    %882 = vmatprep.mubr.f32.mxu0 0.0
    %883 = vmatmul.mubr.f32.gmra.mrb[0].mxu0 %v92
    %v884 = vpop.f32.mrb[0].mxu0
    %v885 = vadd.f32 0.0, %v884
    %v886 = vpop.f32.mrb[0].mxu0
    %887 = vdwg.mxu0
    %v888 = vadd.f32 %v810, %v885
    %v889 = vtanh.pop %v888
    %890 = vst.msk [vmem:[#allocation2] sm:$0x3] %vm166, %v889
    %v892 = vsel %vm90, %v889, 0
    %894 = vmatprep.subr.mxu0 0.0
    %895 = vmatpush1.msra.mxu0 %v58
    %896 = vmatprep.subr.mxu0 0.0
    %897 = vmatpush1.msra.mxu0 %v59
    %898 = vmatprep.subr.mxu0 0.0
    %899 = vmatpush1.msra.mxu0 0.0
    %900 = vmatprep.subr.mxu0 0.0
    %901 = vmatpush1.msra.mxu0 0.0
    %902 = vmatprep.subr.mxu0 0.0
    %903 = vmatpush1.msra.mxu0 0.0
    %904 = vmatprep.subr.mxu0 0.0
    %905 = vmatpush1.msra.mxu0 0.0
    %906 = vmatprep.subr.mxu0 0.0
    %907 = vmatpush1.msra.mxu0 0.0
    %908 = vmatprep.subr.mxu0 0.0
    %909 = vmatpush1.msra.mxu0 0.0
    %910 = vmatprep.subr.mxu0 0.0
    %911 = vmatpush1.msra.mxu0 0.0
    %912 = vmatprep.subr.mxu0 0.0
    %913 = vmatpush1.msra.mxu0 0.0
    %914 = vmatprep.subr.mxu0 0.0
    %915 = vmatpush1.msra.mxu0 0.0
    %916 = vmatprep.subr.mxu0 0.0
    %917 = vmatpush1.msra.mxu0 0.0
    %918 = vmatprep.subr.mxu0 0.0
    %919 = vmatpush1.msra.mxu0 0.0
    %920 = vmatprep.subr.mxu0 0.0
    %921 = vmatpush1.msra.mxu0 0.0
    %922 = vmatprep.subr.mxu0 0.0
    %923 = vmatpush1.msra.mxu0 0.0
    %924 = vmatprep.subr.mxu0 0.0
    %925 = vmatpush1.msra.mxu0 0.0
    %926 = vmatprep.subr.mxu0 0.0
    %927 = vmatpush1.msra.mxu0 0.0
    %928 = vmatprep.subr.mxu0 0.0
    %929 = vmatpush1.msra.mxu0 0.0
    %930 = vmatprep.subr.mxu0 0.0
    %931 = vmatpush1.msra.mxu0 0.0
    %932 = vmatprep.subr.mxu0 0.0
    %933 = vmatpush1.msra.mxu0 0.0
    %934 = vmatprep.subr.mxu0 0.0
    %935 = vmatpush1.msra.mxu0 0.0
    %936 = vmatprep.subr.mxu0 0.0
    %937 = vmatpush1.msra.mxu0 0.0
    %938 = vmatprep.subr.mxu0 0.0
    %939 = vmatpush1.msra.mxu0 0.0
    %940 = vmatprep.subr.mxu0 0.0
    %941 = vmatpush1.msra.mxu0 0.0
    %942 = vmatprep.subr.mxu0 0.0
    %943 = vmatpush1.msra.mxu0 0.0
    %944 = vmatprep.subr.mxu0 0.0
    %945 = vmatpush1.msra.mxu0 0.0
    %946 = vmatprep.subr.mxu0 0.0
    %947 = vmatpush1.msra.mxu0 0.0
    %948 = vmatprep.subr.mxu0 0.0
    %949 = vmatpush1.msra.mxu0 0.0
    %950 = vmatprep.subr.mxu0 0.0
    %951 = vmatpush1.msra.mxu0 0.0
    %952 = vmatprep.subr.mxu0 0.0
    %953 = vmatpush1.msra.mxu0 0.0
    %954 = vmatprep.subr.mxu0 0.0
    %955 = vmatpush1.msra.mxu0 0.0
    %956 = vmatprep.subr.mxu0 0.0
    %957 = vmatpush1.msra.mxu0 0.0
    %958 = vmatprep.mubr.f32.mxu0 0.0
    %959 = vmatmul.mubr.f32.gmra.mrb[0].mxu0 %v892
    %v960 = vpop.f32.mrb[0].mxu0
    %v961 = vadd.f32 0.0, %v960
    %v962 = vpop.f32.mrb[0].mxu0
    %963 = vdwg.mxu0
    %v965 = vrot.slane %v961, 6
    %v967 = vadd.f32 %v810, %v965
    %v968 = vtanh.pop %v967
    %969 = vst.msk [vmem:[#allocation2] sm:$0xc] %vm246, %v968
    %v971 = vrot.slane %v968, 2
    %v972 = vsel %vm90, %v971, 0
    %974 = vmatprep.subr.mxu0 0.0
    %975 = vmatpush1.msra.mxu0 %v58
    %976 = vmatprep.subr.mxu0 0.0
    %977 = vmatpush1.msra.mxu0 %v59
    %978 = vmatprep.subr.mxu0 0.0
    %979 = vmatpush1.msra.mxu0 0.0
    %980 = vmatprep.subr.mxu0 0.0
    %981 = vmatpush1.msra.mxu0 0.0
    %982 = vmatprep.subr.mxu0 0.0
    %983 = vmatpush1.msra.mxu0 0.0
    %984 = vmatprep.subr.mxu0 0.0
    %985 = vmatpush1.msra.mxu0 0.0
    %986 = vmatprep.subr.mxu0 0.0
    %987 = vmatpush1.msra.mxu0 0.0
    %988 = vmatprep.subr.mxu0 0.0
    %989 = vmatpush1.msra.mxu0 0.0
    %990 = vmatprep.subr.mxu0 0.0
    %991 = vmatpush1.msra.mxu0 0.0
    %992 = vmatprep.subr.mxu0 0.0
    %993 = vmatpush1.msra.mxu0 0.0
    %994 = vmatprep.subr.mxu0 0.0
    %995 = vmatpush1.msra.mxu0 0.0
    %996 = vmatprep.subr.mxu0 0.0
    %997 = vmatpush1.msra.mxu0 0.0
    %998 = vmatprep.subr.mxu0 0.0
    %999 = vmatpush1.msra.mxu0 0.0
    %1000 = vmatprep.subr.mxu0 0.0
    %1001 = vmatpush1.msra.mxu0 0.0
    %1002 = vmatprep.subr.mxu0 0.0
    %1003 = vmatpush1.msra.mxu0 0.0
    %1004 = vmatprep.subr.mxu0 0.0
    %1005 = vmatpush1.msra.mxu0 0.0
    %1006 = vmatprep.subr.mxu0 0.0
    %1007 = vmatpush1.msra.mxu0 0.0
    %1008 = vmatprep.subr.mxu0 0.0
    %1009 = vmatpush1.msra.mxu0 0.0
    %1010 = vmatprep.subr.mxu0 0.0
    %1011 = vmatpush1.msra.mxu0 0.0
    %1012 = vmatprep.subr.mxu0 0.0
    %1013 = vmatpush1.msra.mxu0 0.0
    %1014 = vmatprep.subr.mxu0 0.0
    %1015 = vmatpush1.msra.mxu0 0.0
    %1016 = vmatprep.subr.mxu0 0.0
    %1017 = vmatpush1.msra.mxu0 0.0
    %1018 = vmatprep.subr.mxu0 0.0
    %1019 = vmatpush1.msra.mxu0 0.0
    %1020 = vmatprep.subr.mxu0 0.0
    %1021 = vmatpush1.msra.mxu0 0.0
    %1022 = vmatprep.subr.mxu0 0.0
    %1023 = vmatpush1.msra.mxu0 0.0
    %1024 = vmatprep.subr.mxu0 0.0
    %1025 = vmatpush1.msra.mxu0 0.0
    %1026 = vmatprep.subr.mxu0 0.0
    %1027 = vmatpush1.msra.mxu0 0.0
    %1028 = vmatprep.subr.mxu0 0.0
    %1029 = vmatpush1.msra.mxu0 0.0
    %1030 = vmatprep.subr.mxu0 0.0
    %1031 = vmatpush1.msra.mxu0 0.0
    %1032 = vmatprep.subr.mxu0 0.0
    %1033 = vmatpush1.msra.mxu0 0.0
    %1034 = vmatprep.subr.mxu0 0.0
    %1035 = vmatpush1.msra.mxu0 0.0
    %1036 = vmatprep.subr.mxu0 0.0
    %1037 = vmatpush1.msra.mxu0 0.0
    %1038 = vmatprep.mubr.f32.mxu0 0.0
    %1039 = vmatmul.mubr.f32.gmra.mrb[0].mxu0 %v972
    %v1040 = vpop.f32.mrb[0].mxu0
    %v1041 = vadd.f32 0.0, %v1040
    %v1042 = vpop.f32.mrb[0].mxu0
    %1043 = vdwg.mxu0
    %v1045 = vrot.slane %v1041, 4
    %v1047 = vadd.f32 %v810, %v1045
    %v1048 = vtanh.pop %v1047
    %1049 = vst.msk [vmem:[#allocation2] sm:$0x30] %vm327, %v1048
    %v1051 = vrot.slane %v1048, 4
    %v1052 = vsel %vm90, %v1051, 0
    %1054 = vmatprep.subr.mxu0 0.0
    %1055 = vmatpush1.msra.mxu0 %v58
    %1056 = vmatprep.subr.mxu0 0.0
    %1057 = vmatpush1.msra.mxu0 %v59
    %1058 = vmatprep.subr.mxu0 0.0
    %1059 = vmatpush1.msra.mxu0 0.0
    %1060 = vmatprep.subr.mxu0 0.0
    %1061 = vmatpush1.msra.mxu0 0.0
    %1062 = vmatprep.subr.mxu0 0.0
    %1063 = vmatpush1.msra.mxu0 0.0
    %1064 = vmatprep.subr.mxu0 0.0
    %1065 = vmatpush1.msra.mxu0 0.0
    %1066 = vmatprep.subr.mxu0 0.0
    %1067 = vmatpush1.msra.mxu0 0.0
    %1068 = vmatprep.subr.mxu0 0.0
    %1069 = vmatpush1.msra.mxu0 0.0
    %1070 = vmatprep.subr.mxu0 0.0
    %1071 = vmatpush1.msra.mxu0 0.0
    %1072 = vmatprep.subr.mxu0 0.0
    %1073 = vmatpush1.msra.mxu0 0.0
    %1074 = vmatprep.subr.mxu0 0.0
    %1075 = vmatpush1.msra.mxu0 0.0
    %1076 = vmatprep.subr.mxu0 0.0
    %1077 = vmatpush1.msra.mxu0 0.0
    %1078 = vmatprep.subr.mxu0 0.0
    %1079 = vmatpush1.msra.mxu0 0.0
    %1080 = vmatprep.subr.mxu0 0.0
    %1081 = vmatpush1.msra.mxu0 0.0
    %1082 = vmatprep.subr.mxu0 0.0
    %1083 = vmatpush1.msra.mxu0 0.0
    %1084 = vmatprep.subr.mxu0 0.0
    %1085 = vmatpush1.msra.mxu0 0.0
    %1086 = vmatprep.subr.mxu0 0.0
    %1087 = vmatpush1.msra.mxu0 0.0
    %1088 = vmatprep.subr.mxu0 0.0
    %1089 = vmatpush1.msra.mxu0 0.0
    %1090 = vmatprep.subr.mxu0 0.0
    %1091 = vmatpush1.msra.mxu0 0.0
    %1092 = vmatprep.subr.mxu0 0.0
    %1093 = vmatpush1.msra.mxu0 0.0
    %1094 = vmatprep.subr.mxu0 0.0
    %1095 = vmatpush1.msra.mxu0 0.0
    %1096 = vmatprep.subr.mxu0 0.0
    %1097 = vmatpush1.msra.mxu0 0.0
    %1098 = vmatprep.subr.mxu0 0.0
    %1099 = vmatpush1.msra.mxu0 0.0
    %1100 = vmatprep.subr.mxu0 0.0
    %1101 = vmatpush1.msra.mxu0 0.0
    %1102 = vmatprep.subr.mxu0 0.0
    %1103 = vmatpush1.msra.mxu0 0.0
    %1104 = vmatprep.subr.mxu0 0.0
    %1105 = vmatpush1.msra.mxu0 0.0
    %1106 = vmatprep.subr.mxu0 0.0
    %1107 = vmatpush1.msra.mxu0 0.0
    %1108 = vmatprep.subr.mxu0 0.0
    %1109 = vmatpush1.msra.mxu0 0.0
    %1110 = vmatprep.subr.mxu0 0.0
    %1111 = vmatpush1.msra.mxu0 0.0
    %1112 = vmatprep.subr.mxu0 0.0
    %1113 = vmatpush1.msra.mxu0 0.0
    %1114 = vmatprep.subr.mxu0 0.0
    %1115 = vmatpush1.msra.mxu0 0.0
    %1116 = vmatprep.subr.mxu0 0.0
    %1117 = vmatpush1.msra.mxu0 0.0
    %1118 = vmatprep.mubr.f32.mxu0 0.0
    %1119 = vmatmul.mubr.f32.gmra.mrb[0].mxu0 %v1052
    %v1120 = vpop.f32.mrb[0].mxu0
    %v1121 = vadd.f32 0.0, %v1120
    %v1122 = vpop.f32.mrb[0].mxu0
    %1123 = vdwg.mxu0
    %v1125 = vrot.slane %v1121, 2
    %v1127 = vadd.f32 %v810, %v1125
    %v1128 = vtanh.pop %v1127
    %1129 = vst.msk [vmem:[#allocation2] sm:$0xc0] %vm408, %v1128
    %v1131 = vrot.slane %v1128, 6
    %v1132 = vsel %vm90, %v1131, 0
    %1134 = vmatprep.subr.mxu0 0.0
    %1135 = vmatpush1.msra.mxu0 %v58
    %1136 = vmatprep.subr.mxu0 0.0
    %1137 = vmatpush1.msra.mxu0 %v59
    %1138 = vmatprep.subr.mxu0 0.0
    %1139 = vmatpush1.msra.mxu0 0.0
    %1140 = vmatprep.subr.mxu0 0.0
    %1141 = vmatpush1.msra.mxu0 0.0
    %1142 = vmatprep.subr.mxu0 0.0
    %1143 = vmatpush1.msra.mxu0 0.0
    %1144 = vmatprep.subr.mxu0 0.0
    %1145 = vmatpush1.msra.mxu0 0.0
    %1146 = vmatprep.subr.mxu0 0.0
    %1147 = vmatpush1.msra.mxu0 0.0
    %1148 = vmatprep.subr.mxu0 0.0
    %1149 = vmatpush1.msra.mxu0 0.0
    %1150 = vmatprep.subr.mxu0 0.0
    %1151 = vmatpush1.msra.mxu0 0.0
    %1152 = vmatprep.subr.mxu0 0.0
    %1153 = vmatpush1.msra.mxu0 0.0
    %1154 = vmatprep.subr.mxu0 0.0
    %1155 = vmatpush1.msra.mxu0 0.0
    %1156 = vmatprep.subr.mxu0 0.0
    %1157 = vmatpush1.msra.mxu0 0.0
    %1158 = vmatprep.subr.mxu0 0.0
    %1159 = vmatpush1.msra.mxu0 0.0
    %1160 = vmatprep.subr.mxu0 0.0
    %1161 = vmatpush1.msra.mxu0 0.0
    %1162 = vmatprep.subr.mxu0 0.0
    %1163 = vmatpush1.msra.mxu0 0.0
    %1164 = vmatprep.subr.mxu0 0.0
    %1165 = vmatpush1.msra.mxu0 0.0
    %1166 = vmatprep.subr.mxu0 0.0
    %1167 = vmatpush1.msra.mxu0 0.0
    %1168 = vmatprep.subr.mxu0 0.0
    %1169 = vmatpush1.msra.mxu0 0.0
    %1170 = vmatprep.subr.mxu0 0.0
    %1171 = vmatpush1.msra.mxu0 0.0
    %1172 = vmatprep.subr.mxu0 0.0
    %1173 = vmatpush1.msra.mxu0 0.0
    %1174 = vmatprep.subr.mxu0 0.0
    %1175 = vmatpush1.msra.mxu0 0.0
    %1176 = vmatprep.subr.mxu0 0.0
    %1177 = vmatpush1.msra.mxu0 0.0
    %1178 = vmatprep.subr.mxu0 0.0
    %1179 = vmatpush1.msra.mxu0 0.0
    %1180 = vmatprep.subr.mxu0 0.0
    %1181 = vmatpush1.msra.mxu0 0.0
    %1182 = vmatprep.subr.mxu0 0.0
    %1183 = vmatpush1.msra.mxu0 0.0
    %1184 = vmatprep.subr.mxu0 0.0
    %1185 = vmatpush1.msra.mxu0 0.0
    %1186 = vmatprep.subr.mxu0 0.0
    %1187 = vmatpush1.msra.mxu0 0.0
    %1188 = vmatprep.subr.mxu0 0.0
    %1189 = vmatpush1.msra.mxu0 0.0
    %1190 = vmatprep.subr.mxu0 0.0
    %1191 = vmatpush1.msra.mxu0 0.0
    %1192 = vmatprep.subr.mxu0 0.0
    %1193 = vmatpush1.msra.mxu0 0.0
    %1194 = vmatprep.subr.mxu0 0.0
    %1195 = vmatpush1.msra.mxu0 0.0
    %1196 = vmatprep.subr.mxu0 0.0
    %1197 = vmatpush1.msra.mxu0 0.0
    %1198 = vmatprep.mubr.f32.mxu0 0.0
    %1199 = vmatmul.mubr.f32.gmra.mrb[0].mxu0 %v1132
    %v1200 = vpop.f32.mrb[0].mxu0
    %v1201 = vadd.f32 0.0, %v1200
    %v1202 = vpop.f32.mrb[0].mxu0
    %1203 = vdwg.mxu0
    %v1204 = vadd.f32 %v815, %v1201
    %v1205 = vtanh.pop %v1204
    %1206 = vst.msk [vmem:[#allocation2 + $0x8] sm:$0x3] %vm166, %v1205
    %v1208 = vsel %vm90, %v1205, 0
    %1210 = vmatprep.subr.mxu0 0.0
    %1211 = vmatpush1.msra.mxu0 %v58
    %1212 = vmatprep.subr.mxu0 0.0
    %1213 = vmatpush1.msra.mxu0 %v59
    %1214 = vmatprep.subr.mxu0 0.0
    %1215 = vmatpush1.msra.mxu0 0.0
    %1216 = vmatprep.subr.mxu0 0.0
    %1217 = vmatpush1.msra.mxu0 0.0
    %1218 = vmatprep.subr.mxu0 0.0
    %1219 = vmatpush1.msra.mxu0 0.0
    %1220 = vmatprep.subr.mxu0 0.0
    %1221 = vmatpush1.msra.mxu0 0.0
    %1222 = vmatprep.subr.mxu0 0.0
    %1223 = vmatpush1.msra.mxu0 0.0
    %1224 = vmatprep.subr.mxu0 0.0
    %1225 = vmatpush1.msra.mxu0 0.0
    %1226 = vmatprep.subr.mxu0 0.0
    %1227 = vmatpush1.msra.mxu0 0.0
    %1228 = vmatprep.subr.mxu0 0.0
    %1229 = vmatpush1.msra.mxu0 0.0
    %1230 = vmatprep.subr.mxu0 0.0
    %1231 = vmatpush1.msra.mxu0 0.0
    %1232 = vmatprep.subr.mxu0 0.0
    %1233 = vmatpush1.msra.mxu0 0.0
    %1234 = vmatprep.subr.mxu0 0.0
    %1235 = vmatpush1.msra.mxu0 0.0
    %1236 = vmatprep.subr.mxu0 0.0
    %1237 = vmatpush1.msra.mxu0 0.0
    %1238 = vmatprep.subr.mxu0 0.0
    %1239 = vmatpush1.msra.mxu0 0.0
    %1240 = vmatprep.subr.mxu0 0.0
    %1241 = vmatpush1.msra.mxu0 0.0
    %1242 = vmatprep.subr.mxu0 0.0
    %1243 = vmatpush1.msra.mxu0 0.0
    %1244 = vmatprep.subr.mxu0 0.0
    %1245 = vmatpush1.msra.mxu0 0.0
    %1246 = vmatprep.subr.mxu0 0.0
    %1247 = vmatpush1.msra.mxu0 0.0
    %1248 = vmatprep.subr.mxu0 0.0
    %1249 = vmatpush1.msra.mxu0 0.0
    %1250 = vmatprep.subr.mxu0 0.0
    %1251 = vmatpush1.msra.mxu0 0.0
    %1252 = vmatprep.subr.mxu0 0.0
    %1253 = vmatpush1.msra.mxu0 0.0
    %1254 = vmatprep.subr.mxu0 0.0
    %1255 = vmatpush1.msra.mxu0 0.0
    %1256 = vmatprep.subr.mxu0 0.0
    %1257 = vmatpush1.msra.mxu0 0.0
    %1258 = vmatprep.subr.mxu0 0.0
    %1259 = vmatpush1.msra.mxu0 0.0
    %1260 = vmatprep.subr.mxu0 0.0
    %1261 = vmatpush1.msra.mxu0 0.0
    %1262 = vmatprep.subr.mxu0 0.0
    %1263 = vmatpush1.msra.mxu0 0.0
    %1264 = vmatprep.subr.mxu0 0.0
    %1265 = vmatpush1.msra.mxu0 0.0
    %1266 = vmatprep.subr.mxu0 0.0
    %1267 = vmatpush1.msra.mxu0 0.0
    %1268 = vmatprep.subr.mxu0 0.0
    %1269 = vmatpush1.msra.mxu0 0.0
    %1270 = vmatprep.subr.mxu0 0.0
    %1271 = vmatpush1.msra.mxu0 0.0
    %1272 = vmatprep.subr.mxu0 0.0
    %1273 = vmatpush1.msra.mxu0 0.0
    %1274 = vmatprep.mubr.f32.mxu0 0.0
    %1275 = vmatmul.mubr.f32.gmra.mrb[0].mxu0 %v1208
    %v1276 = vpop.f32.mrb[0].mxu0
    %v1277 = vadd.f32 0.0, %v1276
    %v1278 = vpop.f32.mrb[0].mxu0
    %1279 = vdwg.mxu0
    %v1281 = vrot.slane %v1277, 6
    %v1283 = vadd.f32 %v815, %v1281
    %v1284 = vtanh.pop %v1283
    %1285 = vst.msk [vmem:[#allocation2 + $0x8] sm:$0xc] %vm246, %v1284
    %v1287 = vrot.slane %v1284, 2
    %v1288 = vsel %vm90, %v1287, 0
    %1290 = vmatprep.subr.mxu0 0.0
    %1291 = vmatpush1.msra.mxu0 %v58
    %1292 = vmatprep.subr.mxu0 0.0
    %1293 = vmatpush1.msra.mxu0 %v59
    %1294 = vmatprep.subr.mxu0 0.0
    %1295 = vmatpush1.msra.mxu0 0.0
    %1296 = vmatprep.subr.mxu0 0.0
    %1297 = vmatpush1.msra.mxu0 0.0
    %1298 = vmatprep.subr.mxu0 0.0
    %1299 = vmatpush1.msra.mxu0 0.0
    %1300 = vmatprep.subr.mxu0 0.0
    %1301 = vmatpush1.msra.mxu0 0.0
    %1302 = vmatprep.subr.mxu0 0.0
    %1303 = vmatpush1.msra.mxu0 0.0
    %1304 = vmatprep.subr.mxu0 0.0
    %1305 = vmatpush1.msra.mxu0 0.0
    %1306 = vmatprep.subr.mxu0 0.0
    %1307 = vmatpush1.msra.mxu0 0.0
    %1308 = vmatprep.subr.mxu0 0.0
    %1309 = vmatpush1.msra.mxu0 0.0
    %1310 = vmatprep.subr.mxu0 0.0
    %1311 = vmatpush1.msra.mxu0 0.0
    %1312 = vmatprep.subr.mxu0 0.0
    %1313 = vmatpush1.msra.mxu0 0.0
    %1314 = vmatprep.subr.mxu0 0.0
    %1315 = vmatpush1.msra.mxu0 0.0
    %1316 = vmatprep.subr.mxu0 0.0
    %1317 = vmatpush1.msra.mxu0 0.0
    %1318 = vmatprep.subr.mxu0 0.0
    %1319 = vmatpush1.msra.mxu0 0.0
    %1320 = vmatprep.subr.mxu0 0.0
    %1321 = vmatpush1.msra.mxu0 0.0
    %1322 = vmatprep.subr.mxu0 0.0
    %1323 = vmatpush1.msra.mxu0 0.0
    %1324 = vmatprep.subr.mxu0 0.0
    %1325 = vmatpush1.msra.mxu0 0.0
    %1326 = vmatprep.subr.mxu0 0.0
    %1327 = vmatpush1.msra.mxu0 0.0
    %1328 = vmatprep.subr.mxu0 0.0
    %1329 = vmatpush1.msra.mxu0 0.0
    %1330 = vmatprep.subr.mxu0 0.0
    %1331 = vmatpush1.msra.mxu0 0.0
    %1332 = vmatprep.subr.mxu0 0.0
    %1333 = vmatpush1.msra.mxu0 0.0
    %1334 = vmatprep.subr.mxu0 0.0
    %1335 = vmatpush1.msra.mxu0 0.0
    %1336 = vmatprep.subr.mxu0 0.0
    %1337 = vmatpush1.msra.mxu0 0.0
    %1338 = vmatprep.subr.mxu0 0.0
    %1339 = vmatpush1.msra.mxu0 0.0
    %1340 = vmatprep.subr.mxu0 0.0
    %1341 = vmatpush1.msra.mxu0 0.0
    %1342 = vmatprep.subr.mxu0 0.0
    %1343 = vmatpush1.msra.mxu0 0.0
    %1344 = vmatprep.subr.mxu0 0.0
    %1345 = vmatpush1.msra.mxu0 0.0
    %1346 = vmatprep.subr.mxu0 0.0
    %1347 = vmatpush1.msra.mxu0 0.0
    %1348 = vmatprep.subr.mxu0 0.0
    %1349 = vmatpush1.msra.mxu0 0.0
    %1350 = vmatprep.subr.mxu0 0.0
    %1351 = vmatpush1.msra.mxu0 0.0
    %1352 = vmatprep.subr.mxu0 0.0
    %1353 = vmatpush1.msra.mxu0 0.0
    %1354 = vmatprep.mubr.f32.mxu0 0.0
    %1355 = vmatmul.mubr.f32.gmra.mrb[0].mxu0 %v1288
    %v1356 = vpop.f32.mrb[0].mxu0
    %v1357 = vadd.f32 0.0, %v1356
    %v1358 = vpop.f32.mrb[0].mxu0
    %1359 = vdwg.mxu0
    %v1361 = vrot.slane %v1357, 4
    %v1363 = vadd.f32 %v815, %v1361
    %v1364 = vtanh.pop %v1363
    %1365 = vst.msk [vmem:[#allocation2 + $0x8] sm:$0x30] %vm327, %v1364
    %v1367 = vrot.slane %v1364, 4
    %v1368 = vsel %vm90, %v1367, 0
    %1370 = vmatprep.subr.mxu0 0.0
    %1371 = vmatpush1.msra.mxu0 %v58
    %1372 = vmatprep.subr.mxu0 0.0
    %1373 = vmatpush1.msra.mxu0 %v59
    %1374 = vmatprep.subr.mxu0 0.0
    %1375 = vmatpush1.msra.mxu0 0.0
    %1376 = vmatprep.subr.mxu0 0.0
    %1377 = vmatpush1.msra.mxu0 0.0
    %1378 = vmatprep.subr.mxu0 0.0
    %1379 = vmatpush1.msra.mxu0 0.0
    %1380 = vmatprep.subr.mxu0 0.0
    %1381 = vmatpush1.msra.mxu0 0.0
    %1382 = vmatprep.subr.mxu0 0.0
    %1383 = vmatpush1.msra.mxu0 0.0
    %1384 = vmatprep.subr.mxu0 0.0
    %1385 = vmatpush1.msra.mxu0 0.0
    %1386 = vmatprep.subr.mxu0 0.0
    %1387 = vmatpush1.msra.mxu0 0.0
    %1388 = vmatprep.subr.mxu0 0.0
    %1389 = vmatpush1.msra.mxu0 0.0
    %1390 = vmatprep.subr.mxu0 0.0
    %1391 = vmatpush1.msra.mxu0 0.0
    %1392 = vmatprep.subr.mxu0 0.0
    %1393 = vmatpush1.msra.mxu0 0.0
    %1394 = vmatprep.subr.mxu0 0.0
    %1395 = vmatpush1.msra.mxu0 0.0
    %1396 = vmatprep.subr.mxu0 0.0
    %1397 = vmatpush1.msra.mxu0 0.0
    %1398 = vmatprep.subr.mxu0 0.0
    %1399 = vmatpush1.msra.mxu0 0.0
    %1400 = vmatprep.subr.mxu0 0.0
    %1401 = vmatpush1.msra.mxu0 0.0
    %1402 = vmatprep.subr.mxu0 0.0
    %1403 = vmatpush1.msra.mxu0 0.0
    %1404 = vmatprep.subr.mxu0 0.0
    %1405 = vmatpush1.msra.mxu0 0.0
    %1406 = vmatprep.subr.mxu0 0.0
    %1407 = vmatpush1.msra.mxu0 0.0
    %1408 = vmatprep.subr.mxu0 0.0
    %1409 = vmatpush1.msra.mxu0 0.0
    %1410 = vmatprep.subr.mxu0 0.0
    %1411 = vmatpush1.msra.mxu0 0.0
    %1412 = vmatprep.subr.mxu0 0.0
    %1413 = vmatpush1.msra.mxu0 0.0
    %1414 = vmatprep.subr.mxu0 0.0
    %1415 = vmatpush1.msra.mxu0 0.0
    %1416 = vmatprep.subr.mxu0 0.0
    %1417 = vmatpush1.msra.mxu0 0.0
    %1418 = vmatprep.subr.mxu0 0.0
    %1419 = vmatpush1.msra.mxu0 0.0
    %1420 = vmatprep.subr.mxu0 0.0
    %1421 = vmatpush1.msra.mxu0 0.0
    %1422 = vmatprep.subr.mxu0 0.0
    %1423 = vmatpush1.msra.mxu0 0.0
    %1424 = vmatprep.subr.mxu0 0.0
    %1425 = vmatpush1.msra.mxu0 0.0
    %1426 = vmatprep.subr.mxu0 0.0
    %1427 = vmatpush1.msra.mxu0 0.0
    %1428 = vmatprep.subr.mxu0 0.0
    %1429 = vmatpush1.msra.mxu0 0.0
    %1430 = vmatprep.subr.mxu0 0.0
    %1431 = vmatpush1.msra.mxu0 0.0
    %1432 = vmatprep.subr.mxu0 0.0
    %1433 = vmatpush1.msra.mxu0 0.0
    %1434 = vmatprep.mubr.f32.mxu0 0.0
    %1435 = vmatmul.mubr.f32.gmra.mrb[0].mxu0 %v1368
    %v1436 = vpop.f32.mrb[0].mxu0
    %v1437 = vadd.f32 0.0, %v1436
    %v1438 = vpop.f32.mrb[0].mxu0
    %1439 = vdwg.mxu0
    %v1441 = vrot.slane %v1437, 2
    %v1443 = vadd.f32 %v815, %v1441
    %v1444 = vtanh.pop %v1443
    %1445 = vst.msk [vmem:[#allocation2 + $0x8] sm:$0xc0] %vm408, %v1444
    %v1446 = vld [vmem:[#allocation2] sm:$0xff]
    %v1447 = vld [vmem:[#allocation2 + $0x8] sm:$0xff]
    %v1448 = vld [vmem:[%s7] sm:$0xff]
    %v1449 = vld [vmem:[%s7 + $0x8] sm:$0xff]
    %v1450 = vld [vmem:[%s8] sm:$0x1]
    %v1452 = vlaneseq
    %v1453 = vshrl.u32 %v1452, 7
    %v1454 = vsub.s32 0, %v1453
    %v1455 = vrot.slane %v1450, %v1454
    %v1458 = vsel %vm90, %v1446, 0
    %v1461 = vsel %vm90, %v1447, 0
    %1463 = vmatprep.subr.mxu0 0.0
    %1464 = vmatpush1.msra.mxu0 %v1448
    %1465 = vmatprep.subr.mxu0 0.0
    %1466 = vmatpush1.msra.mxu0 %v1449
    %1467 = vmatprep.subr.mxu0 0.0
    %1468 = vmatpush1.msra.mxu0 0.0
    %1469 = vmatprep.subr.mxu0 0.0
    %1470 = vmatpush1.msra.mxu0 0.0
    %1471 = vmatprep.subr.mxu0 0.0
    %1472 = vmatpush1.msra.mxu0 0.0
    %1473 = vmatprep.subr.mxu0 0.0
    %1474 = vmatpush1.msra.mxu0 0.0
    %1475 = vmatprep.subr.mxu0 0.0
    %1476 = vmatpush1.msra.mxu0 0.0
    %1477 = vmatprep.subr.mxu0 0.0
    %1478 = vmatpush1.msra.mxu0 0.0
    %1479 = vmatprep.subr.mxu0 0.0
    %1480 = vmatpush1.msra.mxu0 0.0
    %1481 = vmatprep.subr.mxu0 0.0
    %1482 = vmatpush1.msra.mxu0 0.0
    %1483 = vmatprep.subr.mxu0 0.0
    %1484 = vmatpush1.msra.mxu0 0.0
    %1485 = vmatprep.subr.mxu0 0.0
    %1486 = vmatpush1.msra.mxu0 0.0
    %1487 = vmatprep.subr.mxu0 0.0
    %1488 = vmatpush1.msra.mxu0 0.0
    %1489 = vmatprep.subr.mxu0 0.0
    %1490 = vmatpush1.msra.mxu0 0.0
    %1491 = vmatprep.subr.mxu0 0.0
    %1492 = vmatpush1.msra.mxu0 0.0
    %1493 = vmatprep.subr.mxu0 0.0
    %1494 = vmatpush1.msra.mxu0 0.0
    %1495 = vmatprep.subr.mxu0 0.0
    %1496 = vmatpush1.msra.mxu0 0.0
    %1497 = vmatprep.subr.mxu0 0.0
    %1498 = vmatpush1.msra.mxu0 0.0
    %1499 = vmatprep.subr.mxu0 0.0
    %1500 = vmatpush1.msra.mxu0 0.0
    %1501 = vmatprep.subr.mxu0 0.0
    %1502 = vmatpush1.msra.mxu0 0.0
    %1503 = vmatprep.subr.mxu0 0.0
    %1504 = vmatpush1.msra.mxu0 0.0
    %1505 = vmatprep.subr.mxu0 0.0
    %1506 = vmatpush1.msra.mxu0 0.0
    %1507 = vmatprep.subr.mxu0 0.0
    %1508 = vmatpush1.msra.mxu0 0.0
    %1509 = vmatprep.subr.mxu0 0.0
    %1510 = vmatpush1.msra.mxu0 0.0
    %1511 = vmatprep.subr.mxu0 0.0
    %1512 = vmatpush1.msra.mxu0 0.0
    %1513 = vmatprep.subr.mxu0 0.0
    %1514 = vmatpush1.msra.mxu0 0.0
    %1515 = vmatprep.subr.mxu0 0.0
    %1516 = vmatpush1.msra.mxu0 0.0
    %1517 = vmatprep.subr.mxu0 0.0
    %1518 = vmatpush1.msra.mxu0 0.0
    %1519 = vmatprep.subr.mxu0 0.0
    %1520 = vmatpush1.msra.mxu0 0.0
    %1521 = vmatprep.subr.mxu0 0.0
    %1522 = vmatpush1.msra.mxu0 0.0
    %1523 = vmatprep.subr.mxu0 0.0
    %1524 = vmatpush1.msra.mxu0 0.0
    %1525 = vmatprep.subr.mxu0 0.0
    %1526 = vmatpush1.msra.mxu0 0.0
    %1527 = vmatprep.mubr.f32.mxu0 0.0
    %1528 = vmatmul.mubr.f32.gmra.mrb[0].mxu0 %v1458
    %v1529 = vpop.f32.mrb[0].mxu0
    %v1530 = vadd.f32 %v1455, %v1529
    %v1531 = vpop.f32.mrb[0].mxu0
    %1532 = vmatprep.mubr.f32.mxu0 0.0
    %1533 = vmatmul.mubr.f32.gmra.mrb[0].mxu0 %v1461
    %v1534 = vpop.f32.mrb[0].mxu0
    %v1535 = vadd.f32 %v1455, %v1534
    %v1536 = vpop.f32.mrb[0].mxu0
    %1537 = vdwg.mxu0
    %vm1538 = vcmask 39936
    %1539 = vst.msk [vmem:[%s9] sm:$0xff] %vm1538, %v1530
    %1540 = vst.msk [vmem:[%s9 + $0x8] sm:$0xff] %vm1538, %v1535
    // Predicated region
    $region46: #{tpu_custom_call.1} parent=1 // pred_check
      _
    $region47: #{tpu_custom_call.1} parent=1 // pred_check_branch
      %1542 = sbr.rel (0) target = $region49
    $region48: #{tpu_custom_call.1} parent=1 // pred_region
      _
    $region49: #{tpu_custom_call.1} parent=1 // pred_fallthru
      _
    // Predicated region
    $region50: #{tpu_custom_call.1} parent=1 // pred_check
      _
    $region51: #{tpu_custom_call.1} parent=1 // pred_check_branch
      %1544 = sbr.rel (0) target = $region53
    $region52: #{tpu_custom_call.1} parent=1 // pred_region
      _
    $region53: #{tpu_custom_call.1} parent=1 // pred_fallthru
      _
    %1545 = vsyncpa [#allocation4], 1
    %1546 = vsyncpa [#allocation6], 1

</llo_original>
